<compile_context>
chip_gen: v5e
topology: v5e:2x2
jax: 0.10.0
libtpu: 0.0.40
codegen_flags: <defaults>
</compile_context>

<pallas_src>
import jax
import jax.numpy as jnp
from jax import lax
from jax.experimental import pallas as pl
from jax.experimental.pallas import tpu as pltpu

# ----------------------------- configuration --------------------------------
N_NODES = 16
N_EDGES = 64
MUL = 8                    # hidden multiplicity (8x0e + 8x1o)
N_ATTR = 4                 # node_irreps = 4x0e
NUM_BASIS = 8
RADIAL_HIDDEN = 64
N_TP_W = 4 * MUL           # 4 uvu instructions, MUL weights each
N_NEIGHBORS = 1.0
USE_SC = True

INV_SQRT_MUL = 1.0 / (MUL ** 0.5)
INV_SQRT_BASIS = 1.0 / (NUM_BASIS ** 0.5)
INV_SQRT_RH = 1.0 / (RADIAL_HIDDEN ** 0.5)
INV_SQRT_3 = 1.0 / (3.0 ** 0.5)
INV_SQRT_2MUL = 1.0 / ((2 * MUL) ** 0.5)
INV_SQRT_SC = 1.0 / ((MUL * N_ATTR) ** 0.5)


def _mm(a, b):
    return jnp.dot(a, b, preferred_element_type=jnp.float32)


def _swish(x):  # raw_swish
    return x * jax.nn.sigmoid(x)


# ------------------------------- fused kernel --------------------------------
def _nequip_kernel(x_ref, z_ref, sh64_ref, emb_ref, src_ref, dstt_ref,
                   w1_ref, wfc0_ref, wfc1_ref, wfc2_ref, w2_ref, wsc_ref,
                   out_ref):
    n = x_ref.shape[0]
    e = emb_ref.shape[0]

    # ---- lin_1: block-diagonal irreps-wise linear -> one [N,32]@[32,32] matmul
    x = x_ref[...]                                   # [N, 32] = [s | vx | vy | vz]
    h = _mm(x, w1_ref[...]) * INV_SQRT_MUL           # [N, 32]

    # ---- gather h[edge_src]: one-hot built in-kernel from int32 indices,
    #      then a single lane-dense [E,N]@[N,32] MXU matmul.
    src = src_ref[...]                               # [E, 1] int32
    g = (src == lax.broadcasted_iota(jnp.int32, (e, n), 1)).astype(jnp.float32)
    ef = _mm(g, h)                                   # [E, 32]

    # ---- radial MLP (FullyConnectedNet, no bias, raw swish); last layer was
    #      reordered/duplicated on the host so it emits the 64-wide message
    #      weight slab [wA|wD/sqrt3|wB|wC|wB|wC|wB|wC] directly.
    emb = emb_ref[...]
    h1 = _swish(_mm(emb, wfc0_ref[...]) * INV_SQRT_BASIS)
    h2 = _swish(_mm(h1, wfc1_ref[...]) * INV_SQRT_RH)
    w64 = _mm(h2, wfc2_ref[...]) * INV_SQRT_RH       # [E, 64]

    # ---- uvu tensor product: one 64-lane elementwise multiply of three slabs.
    #      message column layout: [A(0e) | D(0e) | Bx | Cx | By | Cy | Bz | Cz]
    sh64 = sh64_ref[...]                             # [E, 64] pre-broadcast sh
    efs = ef[:, 0 * MUL:1 * MUL]
    efx = ef[:, 1 * MUL:2 * MUL]
    efy = ef[:, 2 * MUL:3 * MUL]
    efz = ef[:, 3 * MUL:4 * MUL]
    shx = sh64[:, 2 * MUL:2 * MUL + 1]
    shy = sh64[:, 4 * MUL:4 * MUL + 1]
    shz = sh64[:, 6 * MUL:6 * MUL + 1]
    ef_dot = efx * shx + efy * shy + efz * shz       # 1o x 1o -> 0e (1/sqrt3 folded in wfc2)
    ef64 = jnp.concatenate([efs, ef_dot, efs, efx, efs, efy, efs, efz], axis=-1)
    msg = w64 * ef64 * sh64                          # [E, 64]

    # ---- scatter-mean over edge_dst + 1/n_neighbors (matches reference:
    #      scatter(reduce='mean') followed by h / n_neighbors).
    dstt = dstt_ref[...]                             # [1, E] int32
    s1h = (lax.broadcasted_iota(jnp.int32, (n, e), 0) == dstt).astype(jnp.float32)
    agg_sum = _mm(s1h, msg)                          # [N, 64]
    deg = jnp.sum(s1h, axis=-1, keepdims=True)       # [N, 1]
    agg = agg_sum / (jnp.maximum(deg, 1.0) * N_NEIGHBORS)

    # ---- lin_2 (block-diag, one matmul): [N,64]@[64,40]
    #      output layout: [scalars(8) | gates(8) | vx(8) | vy(8) | vz(8)]
    h40 = _mm(agg, w2_ref[...]) * INV_SQRT_2MUL

    # ---- self-connection FullyConnectedTensorProduct(hidden x 4x0e -> h_out):
    #      outer-product slab [N,128] then a single [N,128]@[128,40] matmul.
    if USE_SC:
        z = z_ref[...]                               # [N, 4]
        xz = jnp.concatenate(
            [x * z[:, v:v + 1] for v in range(N_ATTR)], axis=-1)   # [N, 128]
        h40 = h40 + _mm(xz, wsc_ref[...]) * INV_SQRT_SC

    # ---- Gate: swish on scalars; swish(gates) * gated 1o features.
    scal = h40[:, 0:MUL]
    gate = _swish(h40[:, MUL:2 * MUL])
    vx = h40[:, 2 * MUL:3 * MUL]
    vy = h40[:, 3 * MUL:4 * MUL]
    vz = h40[:, 4 * MUL:5 * MUL]
    # single full-tile store (component-plane layout [s | vx | vy | vz])
    out_ref[...] = jnp.concatenate(
        [_swish(scal), gate * vx, gate * vy, gate * vz], axis=-1)


# --------------------------- host-side weight prep ---------------------------
def _prep_weights(params):
    bd = jax.scipy.linalg.block_diag
    # lin_1: diag(w1s, w1v, w1v, w1v)  -> [32, 32]
    w1 = bd(params['w1s'], params['w1v'], params['w1v'], params['w1v'])
    # radial-MLP final layer reordered to message layout, 1/sqrt(3) folded in.
    wA = params['wfc2'][:, 0 * MUL:1 * MUL]
    wB = params['wfc2'][:, 1 * MUL:2 * MUL]
    wC = params['wfc2'][:, 2 * MUL:3 * MUL]
    wD = params['wfc2'][:, 3 * MUL:4 * MUL] * INV_SQRT_3
    wfc2_64 = jnp.concatenate([wA, wD, wB, wC, wB, wC, wB, wC], axis=1)  # [64, 64]
    # lin_2: diag(w2s, w2v, w2v, w2v)  -> [64, 40]
    w2 = bd(params['w2s'], params['w2v'], params['w2v'], params['w2v'])
    # self-connection: per-attr block-diag stacked along rows -> [128, 40]
    wsc = jnp.concatenate(
        [bd(params['wscs'][v], params['wscv'][v],
            params['wscv'][v], params['wscv'][v]) for v in range(N_ATTR)],
        axis=0)
    return w1, params['wfc0'], params['wfc1'], wfc2_64, w2, wsc


# ------------------------------ pallas wrapper --------------------------------
@jax.jit
def nequip_convolution(params, node_features, node_attrs, edge_sh,
                       edge_src, edge_dst, edge_embedded):
    """Forward pass matching NequIPConvolution.forward for the fixed irreps above."""
    n = node_features.shape[0]
    e = edge_src.shape[0]

    # e3nn layout -> per-component planes [N, 32] = [s | vx | vy | vz]   (glue)
    xs = node_features[:, :MUL]
    xv = node_features[:, MUL:].reshape(n, MUL, 3)
    x32 = jnp.concatenate([xs, xv[:, :, 0], xv[:, :, 1], xv[:, :, 2]], axis=-1)

    # pre-broadcast sh into the 64-wide message layout                   (glue)
    sh0 = edge_sh[:, 0:1]
    shx = edge_sh[:, 1:2]
    shy = edge_sh[:, 2:3]
    shz = edge_sh[:, 3:4]
    one = jnp.ones_like(sh0)
    sh64 = jnp.concatenate(
        [jnp.broadcast_to(c, (e, MUL))
         for c in (sh0, one, shx, sh0, shy, sh0, shz, sh0)], axis=-1)

    src2d = edge_src.astype(jnp.int32).reshape(e, 1)
    dst2d = edge_dst.astype(jnp.int32).reshape(1, e)

    w1, wfc0, wfc1, wfc2_64, w2, wsc = _prep_weights(params)

    args = (x32, node_attrs, sh64, edge_embedded, src2d, dst2d,
            w1, wfc0, wfc1, wfc2_64, w2, wsc)

    out = pl.pallas_call(
        _nequip_kernel,
        out_shape=jax.ShapeDtypeStruct((n, 4 * MUL), jnp.float32),
        in_specs=[pl.BlockSpec(memory_space=pltpu.MemorySpace.VMEM)
                  for _ in args],
        out_specs=pl.BlockSpec(memory_space=pltpu.MemorySpace.VMEM),
    )(*args)

    # reassemble e3nn layout: [8x0e scalars | 8x1o flattened as u*3+m]    (glue)
    out_s = out[:, 0:MUL]
    out_v = jnp.stack([out[:, MUL:2 * MUL],
                       out[:, 2 * MUL:3 * MUL],
                       out[:, 3 * MUL:4 * MUL]], axis=-1).reshape(n, 3 * MUL)
    return jnp.concatenate([out_s, out_v], axis=-1)


# ----------------------------------- main -------------------------------------
if __name__ == "__main__":
    key = jax.random.PRNGKey(0)
    keys = jax.random.split(key, 16)
    std = 0.02  # reset_parameters(): normal_(mean=0.0, std=0.02)

    params = {
        'w1s': std * jax.random.normal(keys[0], (MUL, MUL), jnp.float32),
        'w1v': std * jax.random.normal(keys[1], (MUL, MUL), jnp.float32),
        'wfc0': std * jax.random.normal(keys[2], (NUM_BASIS, RADIAL_HIDDEN), jnp.float32),
        'wfc1': std * jax.random.normal(keys[3], (RADIAL_HIDDEN, RADIAL_HIDDEN), jnp.float32),
        'wfc2': std * jax.random.normal(keys[4], (RADIAL_HIDDEN, N_TP_W), jnp.float32),
        'w2s': std * jax.random.normal(keys[5], (2 * MUL, 2 * MUL), jnp.float32),
        'w2v': std * jax.random.normal(keys[6], (2 * MUL, MUL), jnp.float32),
        'wscs': std * jax.random.normal(keys[7], (N_ATTR, MUL, 2 * MUL), jnp.float32),
        'wscv': std * jax.random.normal(keys[8], (N_ATTR, MUL, MUL), jnp.float32),
    }

    node_features = jax.random.normal(keys[9], (N_NODES, MUL + 3 * MUL), jnp.float32)
    node_attrs = jax.random.normal(keys[10], (N_NODES, N_ATTR), jnp.float32)
    edge_src = jax.random.randint(keys[11], (N_EDGES,), 0, N_NODES)
    edge_dst = jax.random.randint(keys[12], (N_EDGES,), 0, N_NODES)
    vec = jax.random.normal(keys[13], (N_EDGES, 3), jnp.float32)
    unit = vec / jnp.linalg.norm(vec, axis=-1, keepdims=True)
    edge_sh = jnp.concatenate([jnp.ones((N_EDGES, 1), jnp.float32), unit], axis=-1)
    edge_embedded = jax.random.normal(keys[14], (N_EDGES, NUM_BASIS), jnp.float32)

    h_node = nequip_convolution(params, node_features, node_attrs, edge_sh,
                                edge_src, edge_dst, edge_embedded)
    h_node = jax.block_until_ready(h_node)

    assert h_node.shape == (N_NODES, MUL + 3 * MUL)
    assert bool(jnp.all(jnp.isfinite(h_node)))
    print("KERNEL_OK")
</pallas_src>

<mosaic_0001>
module attributes {stable_mosaic.version = 11 : i64} {
  func.func @_nequip_kernel(%arg0: memref<16x32xf32, #tpu.memory_space<vmem>>, %arg1: memref<16x4xf32, #tpu.memory_space<vmem>>, %arg2: memref<64x64xf32, #tpu.memory_space<vmem>>, %arg3: memref<64x8xf32, #tpu.memory_space<vmem>>, %arg4: memref<64x1xi32, #tpu.memory_space<vmem>>, %arg5: memref<1x64xi32, #tpu.memory_space<vmem>>, %arg6: memref<32x32xf32, #tpu.memory_space<vmem>>, %arg7: memref<8x64xf32, #tpu.memory_space<vmem>>, %arg8: memref<64x64xf32, #tpu.memory_space<vmem>>, %arg9: memref<64x64xf32, #tpu.memory_space<vmem>>, %arg10: memref<64x40xf32, #tpu.memory_space<vmem>>, %arg11: memref<128x40xf32, #tpu.memory_space<vmem>>, %arg12: memref<16x32xf32, #tpu.memory_space<vmem>>) attributes {dimension_semantics = [], scalar_prefetch = 0 : i64, scratch_operands = 0 : i64, tpu.core_type = #tpu.core_type<tc>} {
    %c0 = arith.constant 0 : index
    %c0_0 = arith.constant 0 : index
    %0 = vector.load %arg0[%c0, %c0_0] : memref<16x32xf32, #tpu.memory_space<vmem>>, vector<16x32xf32>
    %c0_1 = arith.constant 0 : index
    %c0_2 = arith.constant 0 : index
    %1 = vector.load %arg6[%c0_1, %c0_2] : memref<32x32xf32, #tpu.memory_space<vmem>>, vector<32x32xf32>
    %cst = arith.constant dense<0.000000e+00> : vector<16x32xf32>
    %2 = tpu.matmul %0, %1, %cst {dimension_numbers = #tpu.dot_dimension_numbers<[1], [0], [0], [1], [0, 0, 1, 1], [], []>} : vector<16x32xf32>, vector<32x32xf32>, vector<16x32xf32> -> vector<16x32xf32>
    %cst_3 = arith.constant 0.353553385 : f32
    %3 = vector.broadcast %cst_3 : f32 to vector<16x32xf32>
    %4 = arith.mulf %2, %3 : vector<16x32xf32>
    %c0_4 = arith.constant 0 : index
    %c0_5 = arith.constant 0 : index
    %5 = vector.load %arg4[%c0_4, %c0_5] : memref<64x1xi32, #tpu.memory_space<vmem>>, vector<64x1xi32>
    %6 = tpu.iota {dimensions = array<i32: 1>} : vector<64x16xi32>
    %7 = vector.broadcast %5 : vector<64x1xi32> to vector<64x16xi32>
    %8 = arith.cmpi eq, %7, %6 : vector<64x16xi32>
    %9 = arith.extui %8 : vector<64x16xi1> to vector<64x16xi32>
    %10 = arith.sitofp %9 : vector<64x16xi32> to vector<64x16xf32>
    %cst_6 = arith.constant dense<0.000000e+00> : vector<64x32xf32>
    %11 = tpu.matmul %10, %4, %cst_6 {dimension_numbers = #tpu.dot_dimension_numbers<[1], [0], [0], [1], [0, 0, 1, 1], [], []>} : vector<64x16xf32>, vector<16x32xf32>, vector<64x32xf32> -> vector<64x32xf32>
    %c0_7 = arith.constant 0 : index
    %c0_8 = arith.constant 0 : index
    %12 = vector.load %arg3[%c0_7, %c0_8] : memref<64x8xf32, #tpu.memory_space<vmem>>, vector<64x8xf32>
    %c0_9 = arith.constant 0 : index
    %c0_10 = arith.constant 0 : index
    %13 = vector.load %arg7[%c0_9, %c0_10] : memref<8x64xf32, #tpu.memory_space<vmem>>, vector<8x64xf32>
    %cst_11 = arith.constant dense<0.000000e+00> : vector<64x64xf32>
    %14 = tpu.matmul %12, %13, %cst_11 {dimension_numbers = #tpu.dot_dimension_numbers<[1], [0], [0], [1], [0, 0, 1, 1], [], []>} : vector<64x8xf32>, vector<8x64xf32>, vector<64x64xf32> -> vector<64x64xf32>
    %cst_12 = arith.constant 0.353553385 : f32
    %15 = vector.broadcast %cst_12 : f32 to vector<64x64xf32>
    %16 = arith.mulf %14, %15 : vector<64x64xf32>
    %17 = arith.negf %16 : vector<64x64xf32>
    %18 = math.exp %17 : vector<64x64xf32>
    %cst_13 = arith.constant 1.000000e+00 : f32
    %19 = vector.broadcast %cst_13 : f32 to vector<64x64xf32>
    %20 = arith.addf %19, %18 : vector<64x64xf32>
    %21 = arith.divf %19, %20 : vector<64x64xf32>
    %22 = arith.mulf %16, %21 : vector<64x64xf32>
    %c0_14 = arith.constant 0 : index
    %c0_15 = arith.constant 0 : index
    %23 = vector.load %arg8[%c0_14, %c0_15] : memref<64x64xf32, #tpu.memory_space<vmem>>, vector<64x64xf32>
    %cst_16 = arith.constant dense<0.000000e+00> : vector<64x64xf32>
    %24 = tpu.matmul %22, %23, %cst_16 {dimension_numbers = #tpu.dot_dimension_numbers<[1], [0], [0], [1], [0, 0, 1, 1], [], []>} : vector<64x64xf32>, vector<64x64xf32>, vector<64x64xf32> -> vector<64x64xf32>
    %cst_17 = arith.constant 1.250000e-01 : f32
    %25 = vector.broadcast %cst_17 : f32 to vector<64x64xf32>
    %26 = arith.mulf %24, %25 : vector<64x64xf32>
    %27 = arith.negf %26 : vector<64x64xf32>
    %28 = math.exp %27 : vector<64x64xf32>
    %cst_18 = arith.constant 1.000000e+00 : f32
    %29 = vector.broadcast %cst_18 : f32 to vector<64x64xf32>
    %30 = arith.addf %29, %28 : vector<64x64xf32>
    %31 = arith.divf %29, %30 : vector<64x64xf32>
    %32 = arith.mulf %26, %31 : vector<64x64xf32>
    %c0_19 = arith.constant 0 : index
    %c0_20 = arith.constant 0 : index
    %33 = vector.load %arg9[%c0_19, %c0_20] : memref<64x64xf32, #tpu.memory_space<vmem>>, vector<64x64xf32>
    %cst_21 = arith.constant dense<0.000000e+00> : vector<64x64xf32>
    %34 = tpu.matmul %32, %33, %cst_21 {dimension_numbers = #tpu.dot_dimension_numbers<[1], [0], [0], [1], [0, 0, 1, 1], [], []>} : vector<64x64xf32>, vector<64x64xf32>, vector<64x64xf32> -> vector<64x64xf32>
    %cst_22 = arith.constant 1.250000e-01 : f32
    %35 = vector.broadcast %cst_22 : f32 to vector<64x64xf32>
    %36 = arith.mulf %34, %35 : vector<64x64xf32>
    %c0_23 = arith.constant 0 : index
    %c0_24 = arith.constant 0 : index
    %37 = vector.load %arg2[%c0_23, %c0_24] : memref<64x64xf32, #tpu.memory_space<vmem>>, vector<64x64xf32>
    %38 = vector.extract_strided_slice %11 {offsets = [0, 0], sizes = [64, 8], strides = [1, 1]} : vector<64x32xf32> to vector<64x8xf32>
    %39 = vector.extract_strided_slice %11 {offsets = [0, 8], sizes = [64, 8], strides = [1, 1]} : vector<64x32xf32> to vector<64x8xf32>
    %40 = vector.extract_strided_slice %11 {offsets = [0, 16], sizes = [64, 8], strides = [1, 1]} : vector<64x32xf32> to vector<64x8xf32>
    %41 = vector.extract_strided_slice %11 {offsets = [0, 24], sizes = [64, 8], strides = [1, 1]} : vector<64x32xf32> to vector<64x8xf32>
    %42 = vector.extract_strided_slice %37 {offsets = [0, 16], sizes = [64, 1], strides = [1, 1]} : vector<64x64xf32> to vector<64x1xf32>
    %43 = vector.extract_strided_slice %37 {offsets = [0, 32], sizes = [64, 1], strides = [1, 1]} : vector<64x64xf32> to vector<64x1xf32>
    %44 = vector.extract_strided_slice %37 {offsets = [0, 48], sizes = [64, 1], strides = [1, 1]} : vector<64x64xf32> to vector<64x1xf32>
    %45 = vector.broadcast %42 : vector<64x1xf32> to vector<64x8xf32>
    %46 = arith.mulf %39, %45 : vector<64x8xf32>
    %47 = vector.broadcast %43 : vector<64x1xf32> to vector<64x8xf32>
    %48 = arith.mulf %40, %47 : vector<64x8xf32>
    %49 = arith.addf %46, %48 : vector<64x8xf32>
    %50 = vector.broadcast %44 : vector<64x1xf32> to vector<64x8xf32>
    %51 = arith.mulf %41, %50 : vector<64x8xf32>
    %52 = arith.addf %49, %51 : vector<64x8xf32>
    %53 = tpu.concatenate %38, %52, %38, %39, %38, %40, %38, %41 in 1 : vector<64x8xf32>, vector<64x8xf32>, vector<64x8xf32>, vector<64x8xf32>, vector<64x8xf32>, vector<64x8xf32>, vector<64x8xf32>, vector<64x8xf32> -> vector<64x64xf32>
    %54 = arith.mulf %36, %53 : vector<64x64xf32>
    %55 = arith.mulf %54, %37 : vector<64x64xf32>
    %c0_25 = arith.constant 0 : index
    %c0_26 = arith.constant 0 : index
    %56 = vector.load %arg5[%c0_25, %c0_26] : memref<1x64xi32, #tpu.memory_space<vmem>>, vector<1x64xi32>
    %57 = tpu.iota {dimensions = array<i32: 0>} : vector<16x64xi32>
    %58 = vector.broadcast %56 : vector<1x64xi32> to vector<16x64xi32>
    %59 = arith.cmpi eq, %57, %58 : vector<16x64xi32>
    %60 = arith.extui %59 : vector<16x64xi1> to vector<16x64xi32>
    %61 = arith.sitofp %60 : vector<16x64xi32> to vector<16x64xf32>
    %cst_27 = arith.constant dense<0.000000e+00> : vector<16x64xf32>
    %62 = tpu.matmul %61, %55, %cst_27 {dimension_numbers = #tpu.dot_dimension_numbers<[1], [0], [0], [1], [0, 0, 1, 1], [], []>} : vector<16x64xf32>, vector<64x64xf32>, vector<16x64xf32> -> vector<16x64xf32>
    %cst_28 = arith.constant dense<0.000000e+00> : vector<16xf32>
    %63 = vector.multi_reduction <add>, %61, %cst_28 [1] : vector<16x64xf32> to vector<16xf32>
    %64 = vector.shape_cast %63 : vector<16xf32> to vector<16x1xf32>
    %cst_29 = arith.constant 1.000000e+00 : f32
    %65 = vector.broadcast %cst_29 : f32 to vector<16x1xf32>
    %66 = arith.maximumf %64, %65 : vector<16x1xf32>
    %cst_30 = arith.constant 1.000000e+00 : f32
    %67 = vector.broadcast %cst_30 : f32 to vector<16x1xf32>
    %68 = arith.mulf %66, %67 : vector<16x1xf32>
    %69 = vector.broadcast %68 : vector<16x1xf32> to vector<16x64xf32>
    %70 = arith.divf %62, %69 : vector<16x64xf32>
    %c0_31 = arith.constant 0 : index
    %c0_32 = arith.constant 0 : index
    %71 = vector.load %arg10[%c0_31, %c0_32] : memref<64x40xf32, #tpu.memory_space<vmem>>, vector<64x40xf32>
    %cst_33 = arith.constant dense<0.000000e+00> : vector<16x40xf32>
    %72 = tpu.matmul %70, %71, %cst_33 {dimension_numbers = #tpu.dot_dimension_numbers<[1], [0], [0], [1], [0, 0, 1, 1], [], []>} : vector<16x64xf32>, vector<64x40xf32>, vector<16x40xf32> -> vector<16x40xf32>
    %cst_34 = arith.constant 2.500000e-01 : f32
    %73 = vector.broadcast %cst_34 : f32 to vector<16x40xf32>
    %74 = arith.mulf %72, %73 : vector<16x40xf32>
    %c0_35 = arith.constant 0 : index
    %c0_36 = arith.constant 0 : index
    %75 = vector.load %arg1[%c0_35, %c0_36] : memref<16x4xf32, #tpu.memory_space<vmem>>, vector<16x4xf32>
    %76 = vector.extract_strided_slice %75 {offsets = [0, 0], sizes = [16, 1], strides = [1, 1]} : vector<16x4xf32> to vector<16x1xf32>
    %77 = vector.broadcast %76 : vector<16x1xf32> to vector<16x32xf32>
    %78 = arith.mulf %0, %77 : vector<16x32xf32>
    %79 = vector.extract_strided_slice %75 {offsets = [0, 1], sizes = [16, 1], strides = [1, 1]} : vector<16x4xf32> to vector<16x1xf32>
    %80 = vector.broadcast %79 : vector<16x1xf32> to vector<16x32xf32>
    %81 = arith.mulf %0, %80 : vector<16x32xf32>
    %82 = vector.extract_strided_slice %75 {offsets = [0, 2], sizes = [16, 1], strides = [1, 1]} : vector<16x4xf32> to vector<16x1xf32>
    %83 = vector.broadcast %82 : vector<16x1xf32> to vector<16x32xf32>
    %84 = arith.mulf %0, %83 : vector<16x32xf32>
    %85 = vector.extract_strided_slice %75 {offsets = [0, 3], sizes = [16, 1], strides = [1, 1]} : vector<16x4xf32> to vector<16x1xf32>
    %86 = vector.broadcast %85 : vector<16x1xf32> to vector<16x32xf32>
    %87 = arith.mulf %0, %86 : vector<16x32xf32>
    %88 = tpu.concatenate %78, %81, %84, %87 in 1 : vector<16x32xf32>, vector<16x32xf32>, vector<16x32xf32>, vector<16x32xf32> -> vector<16x128xf32>
    %c0_37 = arith.constant 0 : index
    %c0_38 = arith.constant 0 : index
    %89 = vector.load %arg11[%c0_37, %c0_38] : memref<128x40xf32, #tpu.memory_space<vmem>>, vector<128x40xf32>
    %cst_39 = arith.constant dense<0.000000e+00> : vector<16x40xf32>
    %90 = tpu.matmul %88, %89, %cst_39 {dimension_numbers = #tpu.dot_dimension_numbers<[1], [0], [0], [1], [0, 0, 1, 1], [], []>} : vector<16x128xf32>, vector<128x40xf32>, vector<16x40xf32> -> vector<16x40xf32>
    %cst_40 = arith.constant 0.176776692 : f32
    %91 = vector.broadcast %cst_40 : f32 to vector<16x40xf32>
    %92 = arith.mulf %90, %91 : vector<16x40xf32>
    %93 = arith.addf %74, %92 : vector<16x40xf32>
    %94 = vector.extract_strided_slice %93 {offsets = [0, 0], sizes = [16, 8], strides = [1, 1]} : vector<16x40xf32> to vector<16x8xf32>
    %95 = vector.extract_strided_slice %93 {offsets = [0, 8], sizes = [16, 8], strides = [1, 1]} : vector<16x40xf32> to vector<16x8xf32>
    %96 = arith.negf %95 : vector<16x8xf32>
    %97 = math.exp %96 : vector<16x8xf32>
    %cst_41 = arith.constant 1.000000e+00 : f32
    %98 = vector.broadcast %cst_41 : f32 to vector<16x8xf32>
    %99 = arith.addf %98, %97 : vector<16x8xf32>
    %100 = arith.divf %98, %99 : vector<16x8xf32>
    %101 = arith.mulf %95, %100 : vector<16x8xf32>
    %102 = vector.extract_strided_slice %93 {offsets = [0, 16], sizes = [16, 8], strides = [1, 1]} : vector<16x40xf32> to vector<16x8xf32>
    %103 = vector.extract_strided_slice %93 {offsets = [0, 24], sizes = [16, 8], strides = [1, 1]} : vector<16x40xf32> to vector<16x8xf32>
    %104 = vector.extract_strided_slice %93 {offsets = [0, 32], sizes = [16, 8], strides = [1, 1]} : vector<16x40xf32> to vector<16x8xf32>
    %105 = arith.negf %94 : vector<16x8xf32>
    %106 = math.exp %105 : vector<16x8xf32>
    %cst_42 = arith.constant 1.000000e+00 : f32
    %107 = vector.broadcast %cst_42 : f32 to vector<16x8xf32>
    %108 = arith.addf %107, %106 : vector<16x8xf32>
    %109 = arith.divf %107, %108 : vector<16x8xf32>
    %110 = arith.mulf %94, %109 : vector<16x8xf32>
    %111 = arith.mulf %101, %102 : vector<16x8xf32>
    %112 = arith.mulf %101, %103 : vector<16x8xf32>
    %113 = arith.mulf %101, %104 : vector<16x8xf32>
    %114 = tpu.concatenate %110, %111, %112, %113 in 1 : vector<16x8xf32>, vector<16x8xf32>, vector<16x8xf32>, vector<16x8xf32> -> vector<16x32xf32>
    %c0_43 = arith.constant 0 : index
    %c0_44 = arith.constant 0 : index
    %115 = vector.load %arg12[%c0_43, %c0_44] : memref<16x32xf32, #tpu.memory_space<vmem>>, vector<16x32xf32>
    tpu.vector_store %arg12[%c0_43, %c0_44], %114 {strides = array<i32>} : memref<16x32xf32, #tpu.memory_space<vmem>>, vector<16x32xf32>,
    return
  }
}

</mosaic_0001>

<llo_original>
// kernel: nequip_convolution.1
$region0: #{nequip_convolution.1}
  #allocation0 [shape = 'u32[]', space=smem, size = 0x4, offset = 0x4, fixed_abs, tag = 'smem constant byte address 0x4 - core index']
  #allocation1 [shape = 'u32[72,128]{1,0:T(1,128)}', space=vmem, size = 0x9000, scoped, tag = 'internal scratch']
  %s0 = inlined_call_operand.vmem [shape: f32[16,32], index: 0, kind: input, shape index: {}]
  %s1 = inlined_call_operand.vmem [shape: f32[16,4], index: 1, kind: input, shape index: {}]
  %s2 = inlined_call_operand.vmem [shape: f32[64,64], index: 2, kind: input, shape index: {}]
  %s3 = inlined_call_operand.vmem [shape: f32[64,8], index: 3, kind: input, shape index: {}]
  %s4 = inlined_call_operand.vmem [shape: s32[64,1], index: 4, kind: input, shape index: {}]
  %s5 = inlined_call_operand.vmem [shape: s32[1,64], index: 5, kind: input, shape index: {}]
  %s6 = inlined_call_operand.vmem [shape: f32[32,32], index: 6, kind: input, shape index: {}]
  %s7 = inlined_call_operand.vmem [shape: f32[8,64], index: 7, kind: input, shape index: {}]
  %s8 = inlined_call_operand.vmem [shape: f32[64,64], index: 8, kind: input, shape index: {}]
  %s9 = inlined_call_operand.vmem [shape: f32[64,64], index: 9, kind: input, shape index: {}]
  %s10 = inlined_call_operand.vmem [shape: f32[64,40], index: 10, kind: input, shape index: {}]
  %s11 = inlined_call_operand.vmem [shape: f32[128,40], index: 11, kind: input, shape index: {}]
  %s12 = inlined_call_operand.vmem [shape: f32[16,32], index: 12, kind: output, shape index: {}]
  %s13 = sld [smem:[#allocation0]]
  $region58: #{nequip_convolution.1} parent=0
    _
  %s15 = ssub.s32 1, %s13
  %s16 = scalar_select 0, %s15, %s13
  // Predicated region
  $region2: #{nequip_convolution.1} parent=0 // pred_check
    _
  $region3: #{nequip_convolution.1} parent=0 // pred_check_branch
    %18 = sbr.rel (0) target = $region5
  $region4: #{nequip_convolution.1} parent=0 // pred_region
    _
  $region5: #{nequip_convolution.1} parent=0 // pred_fallthru
    _
  // Predicated region
  $region6: #{nequip_convolution.1} parent=0 // pred_check
    _
  $region7: #{nequip_convolution.1} parent=0 // pred_check_branch
    %20 = sbr.rel (0) target = $region9
  $region8: #{nequip_convolution.1} parent=0 // pred_region
    _
  $region9: #{nequip_convolution.1} parent=0 // pred_fallthru
    _
  // Predicated region
  $region10: #{nequip_convolution.1} parent=0 // pred_check
    _
  $region11: #{nequip_convolution.1} parent=0 // pred_check_branch
    %22 = sbr.rel (0) target = $region13
  $region12: #{nequip_convolution.1} parent=0 // pred_region
    _
  $region13: #{nequip_convolution.1} parent=0 // pred_fallthru
    _
  // Predicated region
  $region14: #{nequip_convolution.1} parent=0 // pred_check
    _
  $region15: #{nequip_convolution.1} parent=0 // pred_check_branch
    %24 = sbr.rel (0) target = $region17
  $region16: #{nequip_convolution.1} parent=0 // pred_region
    _
  $region17: #{nequip_convolution.1} parent=0 // pred_fallthru
    _
  // Predicated region
  $region18: #{nequip_convolution.1} parent=0 // pred_check
    _
  $region19: #{nequip_convolution.1} parent=0 // pred_check_branch
    %26 = sbr.rel (0) target = $region21
  $region20: #{nequip_convolution.1} parent=0 // pred_region
    _
  $region21: #{nequip_convolution.1} parent=0 // pred_fallthru
    _
  // Predicated region
  $region22: #{nequip_convolution.1} parent=0 // pred_check
    _
  $region23: #{nequip_convolution.1} parent=0 // pred_check_branch
    %28 = sbr.rel (0) target = $region25
  $region24: #{nequip_convolution.1} parent=0 // pred_region
    _
  $region25: #{nequip_convolution.1} parent=0 // pred_fallthru
    _
  // Predicated region
  $region26: #{nequip_convolution.1} parent=0 // pred_check
    _
  $region27: #{nequip_convolution.1} parent=0 // pred_check_branch
    %30 = sbr.rel (0) target = $region29
  $region28: #{nequip_convolution.1} parent=0 // pred_region
    _
  $region29: #{nequip_convolution.1} parent=0 // pred_fallthru
    _
  // Predicated region
  $region30: #{nequip_convolution.1} parent=0 // pred_check
    _
  $region31: #{nequip_convolution.1} parent=0 // pred_check_branch
    %32 = sbr.rel (0) target = $region33
  $region32: #{nequip_convolution.1} parent=0 // pred_region
    _
  $region33: #{nequip_convolution.1} parent=0 // pred_fallthru
    _
  // Predicated region
  $region34: #{nequip_convolution.1} parent=0 // pred_check
    _
  $region35: #{nequip_convolution.1} parent=0 // pred_check_branch
    %34 = sbr.rel (0) target = $region37
  $region36: #{nequip_convolution.1} parent=0 // pred_region
    _
  $region37: #{nequip_convolution.1} parent=0 // pred_fallthru
    _
  // Predicated region
  $region38: #{nequip_convolution.1} parent=0 // pred_check
    _
  $region39: #{nequip_convolution.1} parent=0 // pred_check_branch
    %36 = sbr.rel (0) target = $region41
  $region40: #{nequip_convolution.1} parent=0 // pred_region
    _
  $region41: #{nequip_convolution.1} parent=0 // pred_fallthru
    _
  // Predicated region
  $region42: #{nequip_convolution.1} parent=0 // pred_check
    _
  $region43: #{nequip_convolution.1} parent=0 // pred_check_branch
    %38 = sbr.rel (0) target = $region45
  $region44: #{nequip_convolution.1} parent=0 // pred_region
    _
  $region45: #{nequip_convolution.1} parent=0 // pred_fallthru
    _
  // Predicated region
  $region46: #{nequip_convolution.1} parent=0 // pred_check
    _
  $region47: #{nequip_convolution.1} parent=0 // pred_check_branch
    %40 = sbr.rel (0) target = $region49
  $region48: #{nequip_convolution.1} parent=0 // pred_region
    _
  $region49: #{nequip_convolution.1} parent=0 // pred_fallthru
    _
  %v41 = vld [vmem:[%s0] sm:$0xff]
  %v42 = vld [vmem:[%s0 + $0x8] sm:$0xff]
  %v43 = vld [vmem:[%s6] sm:$0xff]
  %v44 = vld [vmem:[%s6 + $0x8] sm:$0xff]
  %v45 = vld [vmem:[%s6 + $0x10] sm:$0xff]
  %v46 = vld [vmem:[%s6 + $0x18] sm:$0xff]
  %vm47 = vcmask 261120
  %v49 = vsel %vm47, %v41, 0
  %v52 = vsel %vm47, %v42, 0
  %54 = vmatpush.msra.mxu0 0.0
  %55 = vmatpush.msra.mxu0 0.0
  %56 = vmatpush.msra.mxu0 0.0
  %57 = vmatpush.msra.mxu0 0.0
  %58 = vmatpush.msra.mxu0 0.0
  %59 = vmatpush.msra.mxu0 0.0
  %60 = vmatpush.msra.mxu0 0.0
  %61 = vmatpush.msra.mxu0 0.0
  %62 = vmatpush.msra.mxu0 0.0
  %63 = vmatpush.msra.mxu0 0.0
  %64 = vmatpush.msra.mxu0 0.0
  %65 = vmatpush.msra.mxu0 0.0
  %66 = vmatpush.msra.mxu0 %v46
  %67 = vmatpush.msra.mxu0 %v45
  %68 = vmatpush.msra.mxu0 %v44
  %69 = vmatpush.msra.mxu0 %v43
  %70 = vmatmul.f32.gmra.mxu0 %v49
  %v71 = vpop.f32.mrf.mxu0
  %v72 = vadd.f32 0.0, %v71
  %73 = vmatmul.f32.gmra.mxu0 %v52
  %v74 = vpop.f32.mrf.mxu0
  %v75 = vadd.f32 0.0, %v74
  %76 = vdwg.mxu0
  %v77 = vmul.f32 %v72, 0.35355338
  %v78 = vmul.f32 %v75, 0.35355338
  %v79 = vld [vmem:[%s4] sm:$0xff]
  %v80 = vld [vmem:[%s4 + $0x8] sm:$0xff]
  %v81 = vld [vmem:[%s4 + $0x10] sm:$0xff]
  %v82 = vld [vmem:[%s4 + $0x18] sm:$0xff]
  %v83 = vld [vmem:[%s4 + $0x20] sm:$0xff]
  %v84 = vld [vmem:[%s4 + $0x28] sm:$0xff]
  %v85 = vld [vmem:[%s4 + $0x30] sm:$0xff]
  %v86 = vld [vmem:[%s4 + $0x38] sm:$0xff]
  %v87 = vlaneseq
  %v88 = vand.u32 %v87, 127
  %89 = vset.pattern.permute.xlu0 0
  %90 = vperm.xlu0 %89, %v79
  %v91 = vpop.permute.xlu0 %90
  %92 = vset.pattern.permute.xlu0 0
  %93 = vperm.xlu0 %92, %v80
  %v94 = vpop.permute.xlu0 %93
  %95 = vset.pattern.permute.xlu0 0
  %96 = vperm.xlu0 %95, %v81
  %v97 = vpop.permute.xlu0 %96
  %98 = vset.pattern.permute.xlu0 0
  %99 = vperm.xlu0 %98, %v82
  %v100 = vpop.permute.xlu0 %99
  %101 = vset.pattern.permute.xlu0 0
  %102 = vperm.xlu0 %101, %v83
  %v103 = vpop.permute.xlu0 %102
  %104 = vset.pattern.permute.xlu0 0
  %105 = vperm.xlu0 %104, %v84
  %v106 = vpop.permute.xlu0 %105
  %107 = vset.pattern.permute.xlu0 0
  %108 = vperm.xlu0 %107, %v85
  %v109 = vpop.permute.xlu0 %108
  %110 = vset.pattern.permute.xlu0 0
  %111 = vperm.xlu0 %110, %v86
  %v112 = vpop.permute.xlu0 %111
  %vm113 = vcmp.eq.s32.totalorder %v91, %v88
  %vm114 = vcmp.eq.s32.totalorder %v94, %v88
  %vm115 = vcmp.eq.s32.totalorder %v97, %v88
  %vm116 = vcmp.eq.s32.totalorder %v100, %v88
  %vm117 = vcmp.eq.s32.totalorder %v103, %v88
  %vm118 = vcmp.eq.s32.totalorder %v106, %v88
  %vm119 = vcmp.eq.s32.totalorder %v109, %v88
  %vm120 = vcmp.eq.s32.totalorder %v112, %v88
  %v121 = vsel %vm113, 1, 0
  %v122 = vsel %vm114, 1, 0
  %v123 = vsel %vm115, 1, 0
  %v124 = vsel %vm116, 1, 0
  %v125 = vsel %vm117, 1, 0
  %v126 = vsel %vm118, 1, 0
  %v127 = vsel %vm119, 1, 0
  %v128 = vsel %vm120, 1, 0
  %v129 = vcvt.s32.f32 %v121
  %v130 = vcvt.s32.f32 %v122
  %v131 = vcvt.s32.f32 %v123
  %v132 = vcvt.s32.f32 %v124
  %v133 = vcvt.s32.f32 %v125
  %v134 = vcvt.s32.f32 %v126
  %v135 = vcvt.s32.f32 %v127
  %v136 = vcvt.s32.f32 %v128
  %vm137 = vcmask 130048
  %v139 = vsel %vm137, %v129, 0
  %v142 = vsel %vm137, %v130, 0
  %v145 = vsel %vm137, %v131, 0
  %v148 = vsel %vm137, %v132, 0
  %v151 = vsel %vm137, %v133, 0
  %v154 = vsel %vm137, %v134, 0
  %v157 = vsel %vm137, %v135, 0
  %v160 = vsel %vm137, %v136, 0
  %162 = vmatpush.msra.mxu0 0.0
  %163 = vmatpush.msra.mxu0 0.0
  %164 = vmatpush.msra.mxu0 0.0
  %165 = vmatpush.msra.mxu0 0.0
  %166 = vmatpush.msra.mxu0 0.0
  %167 = vmatpush.msra.mxu0 0.0
  %168 = vmatpush.msra.mxu0 0.0
  %169 = vmatpush.msra.mxu0 0.0
  %170 = vmatpush.msra.mxu0 0.0
  %171 = vmatpush.msra.mxu0 0.0
  %172 = vmatpush.msra.mxu0 0.0
  %173 = vmatpush.msra.mxu0 0.0
  %174 = vmatpush.msra.mxu0 0.0
  %175 = vmatpush.msra.mxu0 0.0
  %176 = vmatpush.msra.mxu0 %v78
  %177 = vmatpush.msra.mxu0 %v77
  %178 = vmatmul.f32.gmra.mxu0 %v139
  %v179 = vpop.f32.mrf.mxu0
  %v180 = vadd.f32 0.0, %v179
  %181 = vmatmul.f32.gmra.mxu0 %v142
  %v182 = vpop.f32.mrf.mxu0
  %v183 = vadd.f32 0.0, %v182
  %184 = vmatmul.f32.gmra.mxu0 %v145
  %v185 = vpop.f32.mrf.mxu0
  %v186 = vadd.f32 0.0, %v185
  %187 = vmatmul.f32.gmra.mxu0 %v148
  %v188 = vpop.f32.mrf.mxu0
  %v189 = vadd.f32 0.0, %v188
  %190 = vmatmul.f32.gmra.mxu0 %v151
  %v191 = vpop.f32.mrf.mxu0
  %v192 = vadd.f32 0.0, %v191
  %193 = vmatmul.f32.gmra.mxu0 %v154
  %v194 = vpop.f32.mrf.mxu0
  %v195 = vadd.f32 0.0, %v194
  %196 = vmatmul.f32.gmra.mxu0 %v157
  %v197 = vpop.f32.mrf.mxu0
  %v198 = vadd.f32 0.0, %v197
  %199 = vmatmul.f32.gmra.mxu0 %v160
  %v200 = vpop.f32.mrf.mxu0
  %v201 = vadd.f32 0.0, %v200
  %202 = vdwg.mxu0
  %v203 = vld [vmem:[%s3] sm:$0xff]
  %v204 = vld [vmem:[%s3 + $0x8] sm:$0xff]
  %v205 = vld [vmem:[%s3 + $0x10] sm:$0xff]
  %v206 = vld [vmem:[%s3 + $0x18] sm:$0xff]
  %v207 = vld [vmem:[%s3 + $0x20] sm:$0xff]
  %v208 = vld [vmem:[%s3 + $0x28] sm:$0xff]
  %v209 = vld [vmem:[%s3 + $0x30] sm:$0xff]
  %v210 = vld [vmem:[%s3 + $0x38] sm:$0xff]
  %v211 = vld [vmem:[%s7] sm:$0xff]
  %vm212 = vcmask 64512
  %v214 = vsel %vm212, %v203, 0
  %v217 = vsel %vm212, %v204, 0
  %v220 = vsel %vm212, %v205, 0
  %v223 = vsel %vm212, %v206, 0
  %v226 = vsel %vm212, %v207, 0
  %v229 = vsel %vm212, %v208, 0
  %v232 = vsel %vm212, %v209, 0
  %v235 = vsel %vm212, %v210, 0
  %237 = vmatpush.msra.mxu0 0.0
  %238 = vmatpush.msra.mxu0 0.0
  %239 = vmatpush.msra.mxu0 0.0
  %240 = vmatpush.msra.mxu0 0.0
  %241 = vmatpush.msra.mxu0 0.0
  %242 = vmatpush.msra.mxu0 0.0
  %243 = vmatpush.msra.mxu0 0.0
  %244 = vmatpush.msra.mxu0 0.0
  %245 = vmatpush.msra.mxu0 0.0
  %246 = vmatpush.msra.mxu0 0.0
  %247 = vmatpush.msra.mxu0 0.0
  %248 = vmatpush.msra.mxu0 0.0
  %249 = vmatpush.msra.mxu0 0.0
  %250 = vmatpush.msra.mxu0 0.0
  %251 = vmatpush.msra.mxu0 0.0
  %252 = vmatpush.msra.mxu0 %v211
  %253 = vmatmul.f32.gmra.mxu0 %v214
  %v254 = vpop.f32.mrf.mxu0
  %v255 = vadd.f32 0.0, %v254
  %256 = vmatmul.f32.gmra.mxu0 %v217
  %v257 = vpop.f32.mrf.mxu0
  %v258 = vadd.f32 0.0, %v257
  %259 = vmatmul.f32.gmra.mxu0 %v220
  %v260 = vpop.f32.mrf.mxu0
  %v261 = vadd.f32 0.0, %v260
  %262 = vmatmul.f32.gmra.mxu0 %v223
  %v263 = vpop.f32.mrf.mxu0
  %v264 = vadd.f32 0.0, %v263
  %265 = vmatmul.f32.gmra.mxu0 %v226
  %v266 = vpop.f32.mrf.mxu0
  %v267 = vadd.f32 0.0, %v266
  %268 = vmatmul.f32.gmra.mxu0 %v229
  %v269 = vpop.f32.mrf.mxu0
  %v270 = vadd.f32 0.0, %v269
  %271 = vmatmul.f32.gmra.mxu0 %v232
  %v272 = vpop.f32.mrf.mxu0
  %v273 = vadd.f32 0.0, %v272
  %274 = vmatmul.f32.gmra.mxu0 %v235
  %v275 = vpop.f32.mrf.mxu0
  %v276 = vadd.f32 0.0, %v275
  %277 = vdwg.mxu0
  %v278 = vmul.f32 %v255, 0.35355338
  %v279 = vmul.f32 %v258, 0.35355338
  %v280 = vmul.f32 %v261, 0.35355338
  %v281 = vmul.f32 %v264, 0.35355338
  %v282 = vmul.f32 %v267, 0.35355338
  %v283 = vmul.f32 %v270, 0.35355338
  %v284 = vmul.f32 %v273, 0.35355338
  %v285 = vmul.f32 %v276, 0.35355338
  %v286 = vxor.u32 %v278, 2147483648
  %v287 = vxor.u32 %v279, 2147483648
  %v288 = vxor.u32 %v280, 2147483648
  %v289 = vxor.u32 %v281, 2147483648
  %v290 = vxor.u32 %v282, 2147483648
  %v291 = vxor.u32 %v283, 2147483648
  %v292 = vxor.u32 %v284, 2147483648
  %v293 = vxor.u32 %v285, 2147483648
  %v294 = vmul.f32 %v286, 1.442695
  %v295 = vpow.pop %v294
  %v296 = vmul.f32 %v287, 1.442695
  %v297 = vpow.pop %v296
  %v298 = vmul.f32 %v288, 1.442695
  %v299 = vpow.pop %v298
  %v300 = vmul.f32 %v289, 1.442695
  %v301 = vpow.pop %v300
  %v302 = vmul.f32 %v290, 1.442695
  %v303 = vpow.pop %v302
  %v304 = vmul.f32 %v291, 1.442695
  %v305 = vpow.pop %v304
  %v306 = vmul.f32 %v292, 1.442695
  %v307 = vpow.pop %v306
  %v308 = vmul.f32 %v293, 1.442695
  %v309 = vpow.pop %v308
  %v310 = vadd.f32 %v295, 1.0
  %v311 = vadd.f32 %v297, 1.0
  %v312 = vadd.f32 %v299, 1.0
  %v313 = vadd.f32 %v301, 1.0
  %v314 = vadd.f32 %v303, 1.0
  %v315 = vadd.f32 %v305, 1.0
  %v316 = vadd.f32 %v307, 1.0
  %v317 = vadd.f32 %v309, 1.0
  %v318 = vrcp.pop %v310
  %v319 = vmul.f32 %v310, %v318
  %v320 = vsub.f32 1.0, %v319
  %v321 = vmul.f32 %v318, %v320
  %v322 = vadd.f32 %v318, %v321
  %vm323 = vweird.f32 %v310
  %vm324 = vweird.f32 %v318
  %vm325 = vmor %vm323, %vm324
  %v326 = vsel %vm325, %v318, %v322
  %v327 = vand.u32 2147483647, %v310
  %vm328 = vcmp.eq.f32.partialorder %v327, 8.507059e+37
  %v329 = vand.u32 %v310, 2147483648
  %v330 = vor.u32 1.1754944e-38, %v329
  %v331 = vsel %vm328, %v330, %v326
  %v332 = vmul.f32 1.0, %v331
  %v333 = vrcp.pop %v311
  %v334 = vmul.f32 %v311, %v333
  %v335 = vsub.f32 1.0, %v334
  %v336 = vmul.f32 %v333, %v335
  %v337 = vadd.f32 %v333, %v336
  %vm338 = vweird.f32 %v311
  %vm339 = vweird.f32 %v333
  %vm340 = vmor %vm338, %vm339
  %v341 = vsel %vm340, %v333, %v337
  %v342 = vand.u32 2147483647, %v311
  %vm343 = vcmp.eq.f32.partialorder %v342, 8.507059e+37
  %v344 = vand.u32 %v311, 2147483648
  %v345 = vor.u32 1.1754944e-38, %v344
  %v346 = vsel %vm343, %v345, %v341
  %v347 = vmul.f32 1.0, %v346
  %v348 = vrcp.pop %v312
  %v349 = vmul.f32 %v312, %v348
  %v350 = vsub.f32 1.0, %v349
  %v351 = vmul.f32 %v348, %v350
  %v352 = vadd.f32 %v348, %v351
  %vm353 = vweird.f32 %v312
  %vm354 = vweird.f32 %v348
  %vm355 = vmor %vm353, %vm354
  %v356 = vsel %vm355, %v348, %v352
  %v357 = vand.u32 2147483647, %v312
  %vm358 = vcmp.eq.f32.partialorder %v357, 8.507059e+37
  %v359 = vand.u32 %v312, 2147483648
  %v360 = vor.u32 1.1754944e-38, %v359
  %v361 = vsel %vm358, %v360, %v356
  %v362 = vmul.f32 1.0, %v361
  %v363 = vrcp.pop %v313
  %v364 = vmul.f32 %v313, %v363
  %v365 = vsub.f32 1.0, %v364
  %v366 = vmul.f32 %v363, %v365
  %v367 = vadd.f32 %v363, %v366
  %vm368 = vweird.f32 %v313
  %vm369 = vweird.f32 %v363
  %vm370 = vmor %vm368, %vm369
  %v371 = vsel %vm370, %v363, %v367
  %v372 = vand.u32 2147483647, %v313
  %vm373 = vcmp.eq.f32.partialorder %v372, 8.507059e+37
  %v374 = vand.u32 %v313, 2147483648
  %v375 = vor.u32 1.1754944e-38, %v374
  %v376 = vsel %vm373, %v375, %v371
  %v377 = vmul.f32 1.0, %v376
  %v378 = vrcp.pop %v314
  %v379 = vmul.f32 %v314, %v378
  %v380 = vsub.f32 1.0, %v379
  %v381 = vmul.f32 %v378, %v380
  %v382 = vadd.f32 %v378, %v381
  %vm383 = vweird.f32 %v314
  %vm384 = vweird.f32 %v378
  %vm385 = vmor %vm383, %vm384
  %v386 = vsel %vm385, %v378, %v382
  %v387 = vand.u32 2147483647, %v314
  %vm388 = vcmp.eq.f32.partialorder %v387, 8.507059e+37
  %v389 = vand.u32 %v314, 2147483648
  %v390 = vor.u32 1.1754944e-38, %v389
  %v391 = vsel %vm388, %v390, %v386
  %v392 = vmul.f32 1.0, %v391
  %v393 = vrcp.pop %v315
  %v394 = vmul.f32 %v315, %v393
  %v395 = vsub.f32 1.0, %v394
  %v396 = vmul.f32 %v393, %v395
  %v397 = vadd.f32 %v393, %v396
  %vm398 = vweird.f32 %v315
  %vm399 = vweird.f32 %v393
  %vm400 = vmor %vm398, %vm399
  %v401 = vsel %vm400, %v393, %v397
  %v402 = vand.u32 2147483647, %v315
  %vm403 = vcmp.eq.f32.partialorder %v402, 8.507059e+37
  %v404 = vand.u32 %v315, 2147483648
  %v405 = vor.u32 1.1754944e-38, %v404
  %v406 = vsel %vm403, %v405, %v401
  %v407 = vmul.f32 1.0, %v406
  %v408 = vrcp.pop %v316
  %v409 = vmul.f32 %v316, %v408
  %v410 = vsub.f32 1.0, %v409
  %v411 = vmul.f32 %v408, %v410
  %v412 = vadd.f32 %v408, %v411
  %vm413 = vweird.f32 %v316
  %vm414 = vweird.f32 %v408
  %vm415 = vmor %vm413, %vm414
  %v416 = vsel %vm415, %v408, %v412
  %v417 = vand.u32 2147483647, %v316
  %vm418 = vcmp.eq.f32.partialorder %v417, 8.507059e+37
  %v419 = vand.u32 %v316, 2147483648
  %v420 = vor.u32 1.1754944e-38, %v419
  %v421 = vsel %vm418, %v420, %v416
  %v422 = vmul.f32 1.0, %v421
  %v423 = vrcp.pop %v317
  %v424 = vmul.f32 %v317, %v423
  %v425 = vsub.f32 1.0, %v424
  %v426 = vmul.f32 %v423, %v425
  %v427 = vadd.f32 %v423, %v426
  %vm428 = vweird.f32 %v317
  %vm429 = vweird.f32 %v423
  %vm430 = vmor %vm428, %vm429
  %v431 = vsel %vm430, %v423, %v427
  %v432 = vand.u32 2147483647, %v317
  %vm433 = vcmp.eq.f32.partialorder %v432, 8.507059e+37
  %v434 = vand.u32 %v317, 2147483648
  %v435 = vor.u32 1.1754944e-38, %v434
  %v436 = vsel %vm433, %v435, %v431
  %v437 = vmul.f32 1.0, %v436
  %v438 = vmul.f32 %v278, %v332
  %v439 = vmul.f32 %v279, %v347
  %v440 = vmul.f32 %v280, %v362
  %v441 = vmul.f32 %v281, %v377
  %v442 = vmul.f32 %v282, %v392
  %v443 = vmul.f32 %v283, %v407
  %v444 = vmul.f32 %v284, %v422
  %v445 = vmul.f32 %v285, %v437
  %v446 = vld [vmem:[%s8] sm:$0xff]
  %v447 = vld [vmem:[%s8 + $0x8] sm:$0xff]
  %v448 = vld [vmem:[%s8 + $0x10] sm:$0xff]
  %v449 = vld [vmem:[%s8 + $0x18] sm:$0xff]
  %v450 = vld [vmem:[%s8 + $0x20] sm:$0xff]
  %v451 = vld [vmem:[%s8 + $0x28] sm:$0xff]
  %v452 = vld [vmem:[%s8 + $0x30] sm:$0xff]
  %v453 = vld [vmem:[%s8 + $0x38] sm:$0xff]
  %vm454 = vcmask 523264
  %v456 = vsel %vm454, %v438, 0
  %v459 = vsel %vm454, %v439, 0
  %v462 = vsel %vm454, %v440, 0
  %v465 = vsel %vm454, %v441, 0
  %v468 = vsel %vm454, %v442, 0
  %v471 = vsel %vm454, %v443, 0
  %v474 = vsel %vm454, %v444, 0
  %v477 = vsel %vm454, %v445, 0
  %479 = vmatpush.msra.mxu0 0.0
  %480 = vmatpush.msra.mxu0 0.0
  %481 = vmatpush.msra.mxu0 0.0
  %482 = vmatpush.msra.mxu0 0.0
  %483 = vmatpush.msra.mxu0 0.0
  %484 = vmatpush.msra.mxu0 0.0
  %485 = vmatpush.msra.mxu0 0.0
  %486 = vmatpush.msra.mxu0 0.0
  %487 = vmatpush.msra.mxu0 %v453
  %488 = vmatpush.msra.mxu0 %v452
  %489 = vmatpush.msra.mxu0 %v451
  %490 = vmatpush.msra.mxu0 %v450
  %491 = vmatpush.msra.mxu0 %v449
  %492 = vmatpush.msra.mxu0 %v448
  %493 = vmatpush.msra.mxu0 %v447
  %494 = vmatpush.msra.mxu0 %v446
  %495 = vmatmul.f32.gmra.mxu0 %v456
  %v496 = vpop.f32.mrf.mxu0
  %v497 = vadd.f32 0.0, %v496
  %498 = vmatmul.f32.gmra.mxu0 %v459
  %v499 = vpop.f32.mrf.mxu0
  %v500 = vadd.f32 0.0, %v499
  %501 = vmatmul.f32.gmra.mxu0 %v462
  %v502 = vpop.f32.mrf.mxu0
  %v503 = vadd.f32 0.0, %v502
  %504 = vmatmul.f32.gmra.mxu0 %v465
  %v505 = vpop.f32.mrf.mxu0
  %v506 = vadd.f32 0.0, %v505
  %507 = vmatmul.f32.gmra.mxu0 %v468
  %v508 = vpop.f32.mrf.mxu0
  %v509 = vadd.f32 0.0, %v508
  %510 = vmatmul.f32.gmra.mxu0 %v471
  %v511 = vpop.f32.mrf.mxu0
  %v512 = vadd.f32 0.0, %v511
  %513 = vmatmul.f32.gmra.mxu0 %v474
  %v514 = vpop.f32.mrf.mxu0
  %v515 = vadd.f32 0.0, %v514
  %516 = vmatmul.f32.gmra.mxu0 %v477
  %v517 = vpop.f32.mrf.mxu0
  %v518 = vadd.f32 0.0, %v517
  %519 = vdwg.mxu0
  %v520 = vmul.f32 %v497, 0.125
  %v521 = vmul.f32 %v500, 0.125
  %v522 = vmul.f32 %v503, 0.125
  %v523 = vmul.f32 %v506, 0.125
  %v524 = vmul.f32 %v509, 0.125
  %v525 = vmul.f32 %v512, 0.125
  %v526 = vmul.f32 %v515, 0.125
  %v527 = vmul.f32 %v518, 0.125
  %v528 = vxor.u32 %v520, 2147483648
  %v529 = vxor.u32 %v521, 2147483648
  %v530 = vxor.u32 %v522, 2147483648
  %v531 = vxor.u32 %v523, 2147483648
  %v532 = vxor.u32 %v524, 2147483648
  %v533 = vxor.u32 %v525, 2147483648
  %v534 = vxor.u32 %v526, 2147483648
  %v535 = vxor.u32 %v527, 2147483648
  %v536 = vmul.f32 %v528, 1.442695
  %v537 = vpow.pop %v536
  %v538 = vmul.f32 %v529, 1.442695
  %v539 = vpow.pop %v538
  %v540 = vmul.f32 %v530, 1.442695
  %v541 = vpow.pop %v540
  %v542 = vmul.f32 %v531, 1.442695
  %v543 = vpow.pop %v542
  %v544 = vmul.f32 %v532, 1.442695
  %v545 = vpow.pop %v544
  %v546 = vmul.f32 %v533, 1.442695
  %v547 = vpow.pop %v546
  %v548 = vmul.f32 %v534, 1.442695
  %v549 = vpow.pop %v548
  %v550 = vmul.f32 %v535, 1.442695
  %v551 = vpow.pop %v550
  %v552 = vadd.f32 %v537, 1.0
  %v553 = vadd.f32 %v539, 1.0
  %v554 = vadd.f32 %v541, 1.0
  %v555 = vadd.f32 %v543, 1.0
  %v556 = vadd.f32 %v545, 1.0
  %v557 = vadd.f32 %v547, 1.0
  %v558 = vadd.f32 %v549, 1.0
  %v559 = vadd.f32 %v551, 1.0
  %v560 = vrcp.pop %v552
  %v561 = vmul.f32 %v552, %v560
  %v562 = vsub.f32 1.0, %v561
  %v563 = vmul.f32 %v560, %v562
  %v564 = vadd.f32 %v560, %v563
  %vm565 = vweird.f32 %v552
  %vm566 = vweird.f32 %v560
  %vm567 = vmor %vm565, %vm566
  %v568 = vsel %vm567, %v560, %v564
  %v569 = vand.u32 2147483647, %v552
  %vm570 = vcmp.eq.f32.partialorder %v569, 8.507059e+37
  %v571 = vand.u32 %v552, 2147483648
  %v572 = vor.u32 1.1754944e-38, %v571
  %v573 = vsel %vm570, %v572, %v568
  %v574 = vmul.f32 1.0, %v573
  %v575 = vrcp.pop %v553
  %v576 = vmul.f32 %v553, %v575
  %v577 = vsub.f32 1.0, %v576
  %v578 = vmul.f32 %v575, %v577
  %v579 = vadd.f32 %v575, %v578
  %vm580 = vweird.f32 %v553
  %vm581 = vweird.f32 %v575
  %vm582 = vmor %vm580, %vm581
  %v583 = vsel %vm582, %v575, %v579
  %v584 = vand.u32 2147483647, %v553
  %vm585 = vcmp.eq.f32.partialorder %v584, 8.507059e+37
  %v586 = vand.u32 %v553, 2147483648
  %v587 = vor.u32 1.1754944e-38, %v586
  %v588 = vsel %vm585, %v587, %v583
  %v589 = vmul.f32 1.0, %v588
  %v590 = vrcp.pop %v554
  %v591 = vmul.f32 %v554, %v590
  %v592 = vsub.f32 1.0, %v591
  %v593 = vmul.f32 %v590, %v592
  %v594 = vadd.f32 %v590, %v593
  %vm595 = vweird.f32 %v554
  %vm596 = vweird.f32 %v590
  %vm597 = vmor %vm595, %vm596
  %v598 = vsel %vm597, %v590, %v594
  %v599 = vand.u32 2147483647, %v554
  %vm600 = vcmp.eq.f32.partialorder %v599, 8.507059e+37
  %v601 = vand.u32 %v554, 2147483648
  %v602 = vor.u32 1.1754944e-38, %v601
  %v603 = vsel %vm600, %v602, %v598
  %v604 = vmul.f32 1.0, %v603
  %v605 = vrcp.pop %v555
  %v606 = vmul.f32 %v555, %v605
  %v607 = vsub.f32 1.0, %v606
  %v608 = vmul.f32 %v605, %v607
  %v609 = vadd.f32 %v605, %v608
  %vm610 = vweird.f32 %v555
  %vm611 = vweird.f32 %v605
  %vm612 = vmor %vm610, %vm611
  %v613 = vsel %vm612, %v605, %v609
  %v614 = vand.u32 2147483647, %v555
  %vm615 = vcmp.eq.f32.partialorder %v614, 8.507059e+37
  %v616 = vand.u32 %v555, 2147483648
  %v617 = vor.u32 1.1754944e-38, %v616
  %v618 = vsel %vm615, %v617, %v613
  %v619 = vmul.f32 1.0, %v618
  %v620 = vrcp.pop %v556
  %v621 = vmul.f32 %v556, %v620
  %v622 = vsub.f32 1.0, %v621
  %v623 = vmul.f32 %v620, %v622
  %v624 = vadd.f32 %v620, %v623
  %vm625 = vweird.f32 %v556
  %vm626 = vweird.f32 %v620
  %vm627 = vmor %vm625, %vm626
  %v628 = vsel %vm627, %v620, %v624
  %v629 = vand.u32 2147483647, %v556
  %vm630 = vcmp.eq.f32.partialorder %v629, 8.507059e+37
  %v631 = vand.u32 %v556, 2147483648
  %v632 = vor.u32 1.1754944e-38, %v631
  %v633 = vsel %vm630, %v632, %v628
  %v634 = vmul.f32 1.0, %v633
  %v635 = vrcp.pop %v557
  %v636 = vmul.f32 %v557, %v635
  %v637 = vsub.f32 1.0, %v636
  %v638 = vmul.f32 %v635, %v637
  %v639 = vadd.f32 %v635, %v638
  %vm640 = vweird.f32 %v557
  %vm641 = vweird.f32 %v635
  %vm642 = vmor %vm640, %vm641
  %v643 = vsel %vm642, %v635, %v639
  %v644 = vand.u32 2147483647, %v557
  %vm645 = vcmp.eq.f32.partialorder %v644, 8.507059e+37
  %v646 = vand.u32 %v557, 2147483648
  %v647 = vor.u32 1.1754944e-38, %v646
  %v648 = vsel %vm645, %v647, %v643
  %v649 = vmul.f32 1.0, %v648
  %v650 = vrcp.pop %v558
  %v651 = vmul.f32 %v558, %v650
  %v652 = vsub.f32 1.0, %v651
  %v653 = vmul.f32 %v650, %v652
  %v654 = vadd.f32 %v650, %v653
  %vm655 = vweird.f32 %v558
  %vm656 = vweird.f32 %v650
  %vm657 = vmor %vm655, %vm656
  %v658 = vsel %vm657, %v650, %v654
  %v659 = vand.u32 2147483647, %v558
  %vm660 = vcmp.eq.f32.partialorder %v659, 8.507059e+37
  %v661 = vand.u32 %v558, 2147483648
  %v662 = vor.u32 1.1754944e-38, %v661
  %v663 = vsel %vm660, %v662, %v658
  %v664 = vmul.f32 1.0, %v663
  %v665 = vrcp.pop %v559
  %v666 = vmul.f32 %v559, %v665
  %v667 = vsub.f32 1.0, %v666
  %v668 = vmul.f32 %v665, %v667
  %v669 = vadd.f32 %v665, %v668
  %vm670 = vweird.f32 %v559
  %vm671 = vweird.f32 %v665
  %vm672 = vmor %vm670, %vm671
  %v673 = vsel %vm672, %v665, %v669
  %v674 = vand.u32 2147483647, %v559
  %vm675 = vcmp.eq.f32.partialorder %v674, 8.507059e+37
  %v676 = vand.u32 %v559, 2147483648
  %v677 = vor.u32 1.1754944e-38, %v676
  %v678 = vsel %vm675, %v677, %v673
  %v679 = vmul.f32 1.0, %v678
  %v680 = vmul.f32 %v520, %v574
  %v681 = vmul.f32 %v521, %v589
  %v682 = vmul.f32 %v522, %v604
  %v683 = vmul.f32 %v523, %v619
  %v684 = vmul.f32 %v524, %v634
  %v685 = vmul.f32 %v525, %v649
  %v686 = vmul.f32 %v526, %v664
  %v687 = vmul.f32 %v527, %v679
  %v688 = vld [vmem:[%s9] sm:$0xff]
  %v689 = vld [vmem:[%s9 + $0x8] sm:$0xff]
  %v690 = vld [vmem:[%s9 + $0x10] sm:$0xff]
  %v691 = vld [vmem:[%s9 + $0x18] sm:$0xff]
  %v692 = vld [vmem:[%s9 + $0x20] sm:$0xff]
  %v693 = vld [vmem:[%s9 + $0x28] sm:$0xff]
  %v694 = vld [vmem:[%s9 + $0x30] sm:$0xff]
  %v695 = vld [vmem:[%s9 + $0x38] sm:$0xff]
  %v697 = vsel %vm454, %v680, 0
  %v700 = vsel %vm454, %v681, 0
  %v703 = vsel %vm454, %v682, 0
  %v706 = vsel %vm454, %v683, 0
  %v709 = vsel %vm454, %v684, 0
  %v712 = vsel %vm454, %v685, 0
  %v715 = vsel %vm454, %v686, 0
  %v718 = vsel %vm454, %v687, 0
  %720 = vmatpush.msra.mxu0 0.0
  %721 = vmatpush.msra.mxu0 0.0
  %722 = vmatpush.msra.mxu0 0.0
  %723 = vmatpush.msra.mxu0 0.0
  %724 = vmatpush.msra.mxu0 0.0
  %725 = vmatpush.msra.mxu0 0.0
  %726 = vmatpush.msra.mxu0 0.0
  %727 = vmatpush.msra.mxu0 0.0
  %728 = vmatpush.msra.mxu0 %v695
  %729 = vmatpush.msra.mxu0 %v694
  %730 = vmatpush.msra.mxu0 %v693
  %731 = vmatpush.msra.mxu0 %v692
  %732 = vmatpush.msra.mxu0 %v691
  %733 = vmatpush.msra.mxu0 %v690
  %734 = vmatpush.msra.mxu0 %v689
  %735 = vmatpush.msra.mxu0 %v688
  %736 = vmatmul.f32.gmra.mxu0 %v697
  %v737 = vpop.f32.mrf.mxu0
  %v738 = vadd.f32 0.0, %v737
  %739 = vmatmul.f32.gmra.mxu0 %v700
  %v740 = vpop.f32.mrf.mxu0
  %v741 = vadd.f32 0.0, %v740
  %742 = vmatmul.f32.gmra.mxu0 %v703
  %v743 = vpop.f32.mrf.mxu0
  %v744 = vadd.f32 0.0, %v743
  %745 = vmatmul.f32.gmra.mxu0 %v706
  %v746 = vpop.f32.mrf.mxu0
  %v747 = vadd.f32 0.0, %v746
  %748 = vmatmul.f32.gmra.mxu0 %v709
  %v749 = vpop.f32.mrf.mxu0
  %v750 = vadd.f32 0.0, %v749
  %751 = vmatmul.f32.gmra.mxu0 %v712
  %v752 = vpop.f32.mrf.mxu0
  %v753 = vadd.f32 0.0, %v752
  %754 = vmatmul.f32.gmra.mxu0 %v715
  %v755 = vpop.f32.mrf.mxu0
  %v756 = vadd.f32 0.0, %v755
  %757 = vmatmul.f32.gmra.mxu0 %v718
  %v758 = vpop.f32.mrf.mxu0
  %v759 = vadd.f32 0.0, %v758
  %760 = vdwg.mxu0
  %v761 = vmul.f32 %v738, 0.125
  %v762 = vmul.f32 %v741, 0.125
  %v763 = vmul.f32 %v744, 0.125
  %v764 = vmul.f32 %v747, 0.125
  %v765 = vmul.f32 %v750, 0.125
  %v766 = vmul.f32 %v753, 0.125
  %v767 = vmul.f32 %v756, 0.125
  %v768 = vmul.f32 %v759, 0.125
  %v769 = vld [vmem:[%s2] sm:$0xff]
  %v770 = vld [vmem:[%s2 + $0x8] sm:$0xff]
  %v771 = vld [vmem:[%s2 + $0x10] sm:$0xff]
  %v772 = vld [vmem:[%s2 + $0x18] sm:$0xff]
  %v773 = vld [vmem:[%s2 + $0x20] sm:$0xff]
  %v774 = vld [vmem:[%s2 + $0x28] sm:$0xff]
  %v775 = vld [vmem:[%s2 + $0x30] sm:$0xff]
  %v776 = vld [vmem:[%s2 + $0x38] sm:$0xff]
  %778 = vset.pattern.permute.xlu0 16
  %779 = vperm.xlu0 %778, %v769
  %v780 = vpop.permute.xlu0 %779
  %783 = vset.pattern.permute.xlu0 16
  %784 = vperm.xlu0 %783, %v770
  %v785 = vpop.permute.xlu0 %784
  %788 = vset.pattern.permute.xlu0 16
  %789 = vperm.xlu0 %788, %v771
  %v790 = vpop.permute.xlu0 %789
  %793 = vset.pattern.permute.xlu0 16
  %794 = vperm.xlu0 %793, %v772
  %v795 = vpop.permute.xlu0 %794
  %798 = vset.pattern.permute.xlu0 16
  %799 = vperm.xlu0 %798, %v773
  %v800 = vpop.permute.xlu0 %799
  %803 = vset.pattern.permute.xlu0 16
  %804 = vperm.xlu0 %803, %v774
  %v805 = vpop.permute.xlu0 %804
  %808 = vset.pattern.permute.xlu0 16
  %809 = vperm.xlu0 %808, %v775
  %v810 = vpop.permute.xlu0 %809
  %813 = vset.pattern.permute.xlu0 16
  %814 = vperm.xlu0 %813, %v776
  %v815 = vpop.permute.xlu0 %814
  %v817 = vmul.f32 %v180, %v780
  %v818 = vmul.f32 %v183, %v785
  %v819 = vmul.f32 %v186, %v790
  %v820 = vmul.f32 %v189, %v795
  %v821 = vmul.f32 %v192, %v800
  %v822 = vmul.f32 %v195, %v805
  %v823 = vmul.f32 %v198, %v810
  %v824 = vmul.f32 %v201, %v815
  %825 = vset.pattern.permute.xlu0 32
  %826 = vperm.xlu0 %825, %v769
  %v827 = vpop.permute.xlu0 %826
  %829 = vset.pattern.permute.xlu0 32
  %830 = vperm.xlu0 %829, %v770
  %v831 = vpop.permute.xlu0 %830
  %833 = vset.pattern.permute.xlu0 32
  %834 = vperm.xlu0 %833, %v771
  %v835 = vpop.permute.xlu0 %834
  %837 = vset.pattern.permute.xlu0 32
  %838 = vperm.xlu0 %837, %v772
  %v839 = vpop.permute.xlu0 %838
  %841 = vset.pattern.permute.xlu0 32
  %842 = vperm.xlu0 %841, %v773
  %v843 = vpop.permute.xlu0 %842
  %845 = vset.pattern.permute.xlu0 32
  %846 = vperm.xlu0 %845, %v774
  %v847 = vpop.permute.xlu0 %846
  %849 = vset.pattern.permute.xlu0 32
  %850 = vperm.xlu0 %849, %v775
  %v851 = vpop.permute.xlu0 %850
  %853 = vset.pattern.permute.xlu0 32
  %854 = vperm.xlu0 %853, %v776
  %v855 = vpop.permute.xlu0 %854
  %v857 = vmul.f32 %v180, %v827
  %v858 = vmul.f32 %v183, %v831
  %v859 = vmul.f32 %v186, %v835
  %v860 = vmul.f32 %v189, %v839
  %v861 = vmul.f32 %v192, %v843
  %v862 = vmul.f32 %v195, %v847
  %v863 = vmul.f32 %v198, %v851
  %v864 = vmul.f32 %v201, %v855
  %873 = vrot.lane.b32.xlu0 %v857, 120
  %v874 = vpop.permute.xlu0 %873
  %875 = vrot.lane.b32.xlu0 %v858, 120
  %v876 = vpop.permute.xlu0 %875
  %877 = vrot.lane.b32.xlu0 %v859, 120
  %v878 = vpop.permute.xlu0 %877
  %879 = vrot.lane.b32.xlu0 %v860, 120
  %v880 = vpop.permute.xlu0 %879
  %881 = vrot.lane.b32.xlu0 %v861, 120
  %v882 = vpop.permute.xlu0 %881
  %883 = vrot.lane.b32.xlu0 %v862, 120
  %v884 = vpop.permute.xlu0 %883
  %885 = vrot.lane.b32.xlu0 %v863, 120
  %v886 = vpop.permute.xlu0 %885
  %887 = vrot.lane.b32.xlu0 %v864, 120
  %v888 = vpop.permute.xlu0 %887
  %v897 = vadd.f32 %v817, %v874
  %v898 = vadd.f32 %v818, %v876
  %v899 = vadd.f32 %v819, %v878
  %v900 = vadd.f32 %v820, %v880
  %v901 = vadd.f32 %v821, %v882
  %v902 = vadd.f32 %v822, %v884
  %v903 = vadd.f32 %v823, %v886
  %v904 = vadd.f32 %v824, %v888
  %905 = vset.pattern.permute.xlu0 48
  %906 = vperm.xlu0 %905, %v769
  %v907 = vpop.permute.xlu0 %906
  %909 = vset.pattern.permute.xlu0 48
  %910 = vperm.xlu0 %909, %v770
  %v911 = vpop.permute.xlu0 %910
  %913 = vset.pattern.permute.xlu0 48
  %914 = vperm.xlu0 %913, %v771
  %v915 = vpop.permute.xlu0 %914
  %917 = vset.pattern.permute.xlu0 48
  %918 = vperm.xlu0 %917, %v772
  %v919 = vpop.permute.xlu0 %918
  %921 = vset.pattern.permute.xlu0 48
  %922 = vperm.xlu0 %921, %v773
  %v923 = vpop.permute.xlu0 %922
  %925 = vset.pattern.permute.xlu0 48
  %926 = vperm.xlu0 %925, %v774
  %v927 = vpop.permute.xlu0 %926
  %929 = vset.pattern.permute.xlu0 48
  %930 = vperm.xlu0 %929, %v775
  %v931 = vpop.permute.xlu0 %930
  %933 = vset.pattern.permute.xlu0 48
  %934 = vperm.xlu0 %933, %v776
  %v935 = vpop.permute.xlu0 %934
  %v937 = vmul.f32 %v180, %v907
  %v938 = vmul.f32 %v183, %v911
  %v939 = vmul.f32 %v186, %v915
  %v940 = vmul.f32 %v189, %v919
  %v941 = vmul.f32 %v192, %v923
  %v942 = vmul.f32 %v195, %v927
  %v943 = vmul.f32 %v198, %v931
  %v944 = vmul.f32 %v201, %v935
  %953 = vrot.lane.b32.xlu0 %v937, 112
  %v954 = vpop.permute.xlu0 %953
  %955 = vrot.lane.b32.xlu0 %v938, 112
  %v956 = vpop.permute.xlu0 %955
  %957 = vrot.lane.b32.xlu0 %v939, 112
  %v958 = vpop.permute.xlu0 %957
  %959 = vrot.lane.b32.xlu0 %v940, 112
  %v960 = vpop.permute.xlu0 %959
  %961 = vrot.lane.b32.xlu0 %v941, 112
  %v962 = vpop.permute.xlu0 %961
  %963 = vrot.lane.b32.xlu0 %v942, 112
  %v964 = vpop.permute.xlu0 %963
  %965 = vrot.lane.b32.xlu0 %v943, 112
  %v966 = vpop.permute.xlu0 %965
  %967 = vrot.lane.b32.xlu0 %v944, 112
  %v968 = vpop.permute.xlu0 %967
  %v977 = vadd.f32 %v897, %v954
  %v978 = vadd.f32 %v898, %v956
  %v979 = vadd.f32 %v899, %v958
  %v980 = vadd.f32 %v900, %v960
  %v981 = vadd.f32 %v901, %v962
  %v982 = vadd.f32 %v902, %v964
  %v983 = vadd.f32 %v903, %v966
  %v984 = vadd.f32 %v904, %v968
  %993 = vrot.lane.b32.xlu0 %v180, 16
  %v994 = vpop.permute.xlu0 %993
  %995 = vrot.lane.b32.xlu0 %v183, 16
  %v996 = vpop.permute.xlu0 %995
  %997 = vrot.lane.b32.xlu0 %v186, 16
  %v998 = vpop.permute.xlu0 %997
  %999 = vrot.lane.b32.xlu0 %v189, 16
  %v1000 = vpop.permute.xlu0 %999
  %1001 = vrot.lane.b32.xlu0 %v192, 16
  %v1002 = vpop.permute.xlu0 %1001
  %1003 = vrot.lane.b32.xlu0 %v195, 16
  %v1004 = vpop.permute.xlu0 %1003
  %1005 = vrot.lane.b32.xlu0 %v198, 16
  %v1006 = vpop.permute.xlu0 %1005
  %1007 = vrot.lane.b32.xlu0 %v201, 16
  %v1008 = vpop.permute.xlu0 %1007
  %1017 = vrot.lane.b32.xlu0 %v180, 32
  %v1018 = vpop.permute.xlu0 %1017
  %1019 = vrot.lane.b32.xlu0 %v183, 32
  %v1020 = vpop.permute.xlu0 %1019
  %1021 = vrot.lane.b32.xlu0 %v186, 32
  %v1022 = vpop.permute.xlu0 %1021
  %1023 = vrot.lane.b32.xlu0 %v189, 32
  %v1024 = vpop.permute.xlu0 %1023
  %1025 = vrot.lane.b32.xlu0 %v192, 32
  %v1026 = vpop.permute.xlu0 %1025
  %1027 = vrot.lane.b32.xlu0 %v195, 32
  %v1028 = vpop.permute.xlu0 %1027
  %1029 = vrot.lane.b32.xlu0 %v198, 32
  %v1030 = vpop.permute.xlu0 %1029
  %1031 = vrot.lane.b32.xlu0 %v201, 32
  %v1032 = vpop.permute.xlu0 %1031
  %1041 = vrot.lane.b32.xlu0 %v180, 24
  %v1042 = vpop.permute.xlu0 %1041
  %1043 = vrot.lane.b32.xlu0 %v183, 24
  %v1044 = vpop.permute.xlu0 %1043
  %1045 = vrot.lane.b32.xlu0 %v186, 24
  %v1046 = vpop.permute.xlu0 %1045
  %1047 = vrot.lane.b32.xlu0 %v189, 24
  %v1048 = vpop.permute.xlu0 %1047
  %1049 = vrot.lane.b32.xlu0 %v192, 24
  %v1050 = vpop.permute.xlu0 %1049
  %1051 = vrot.lane.b32.xlu0 %v195, 24
  %v1052 = vpop.permute.xlu0 %1051
  %1053 = vrot.lane.b32.xlu0 %v198, 24
  %v1054 = vpop.permute.xlu0 %1053
  %1055 = vrot.lane.b32.xlu0 %v201, 24
  %v1056 = vpop.permute.xlu0 %1055
  %1065 = vrot.lane.b32.xlu0 %v180, 48
  %v1066 = vpop.permute.xlu0 %1065
  %1067 = vrot.lane.b32.xlu0 %v183, 48
  %v1068 = vpop.permute.xlu0 %1067
  %1069 = vrot.lane.b32.xlu0 %v186, 48
  %v1070 = vpop.permute.xlu0 %1069
  %1071 = vrot.lane.b32.xlu0 %v189, 48
  %v1072 = vpop.permute.xlu0 %1071
  %1073 = vrot.lane.b32.xlu0 %v192, 48
  %v1074 = vpop.permute.xlu0 %1073
  %1075 = vrot.lane.b32.xlu0 %v195, 48
  %v1076 = vpop.permute.xlu0 %1075
  %1077 = vrot.lane.b32.xlu0 %v198, 48
  %v1078 = vpop.permute.xlu0 %1077
  %1079 = vrot.lane.b32.xlu0 %v201, 48
  %v1080 = vpop.permute.xlu0 %1079
  %v1089 = vsel %vm212, %v180, %v977
  %v1090 = vsel %vm212, %v183, %v978
  %v1091 = vsel %vm212, %v186, %v979
  %v1092 = vsel %vm212, %v189, %v980
  %v1093 = vsel %vm212, %v192, %v981
  %v1094 = vsel %vm212, %v195, %v982
  %v1095 = vsel %vm212, %v198, %v983
  %v1096 = vsel %vm212, %v201, %v984
  %v1097 = vsel %vm137, %v1089, %v994
  %v1098 = vsel %vm137, %v1090, %v996
  %v1099 = vsel %vm137, %v1091, %v998
  %v1100 = vsel %vm137, %v1092, %v1000
  %v1101 = vsel %vm137, %v1093, %v1002
  %v1102 = vsel %vm137, %v1094, %v1004
  %v1103 = vsel %vm137, %v1095, %v1006
  %v1104 = vsel %vm137, %v1096, %v1008
  %vm1105 = vcmask 195584
  %v1106 = vsel %vm1105, %v1097, %v994
  %v1107 = vsel %vm1105, %v1098, %v996
  %v1108 = vsel %vm1105, %v1099, %v998
  %v1109 = vsel %vm1105, %v1100, %v1000
  %v1110 = vsel %vm1105, %v1101, %v1002
  %v1111 = vsel %vm1105, %v1102, %v1004
  %v1112 = vsel %vm1105, %v1103, %v1006
  %v1113 = vsel %vm1105, %v1104, %v1008
  %v1114 = vsel %vm47, %v1106, %v1018
  %v1115 = vsel %vm47, %v1107, %v1020
  %v1116 = vsel %vm47, %v1108, %v1022
  %v1117 = vsel %vm47, %v1109, %v1024
  %v1118 = vsel %vm47, %v1110, %v1026
  %v1119 = vsel %vm47, %v1111, %v1028
  %v1120 = vsel %vm47, %v1112, %v1030
  %v1121 = vsel %vm47, %v1113, %v1032
  %vm1122 = vcmask 326656
  %v1123 = vsel %vm1122, %v1114, %v1042
  %v1124 = vsel %vm1122, %v1115, %v1044
  %v1125 = vsel %vm1122, %v1116, %v1046
  %v1126 = vsel %vm1122, %v1117, %v1048
  %v1127 = vsel %vm1122, %v1118, %v1050
  %v1128 = vsel %vm1122, %v1119, %v1052
  %v1129 = vsel %vm1122, %v1120, %v1054
  %v1130 = vsel %vm1122, %v1121, %v1056
  %vm1131 = vcmask 392192
  %v1132 = vsel %vm1131, %v1123, %v1066
  %v1133 = vsel %vm1131, %v1124, %v1068
  %v1134 = vsel %vm1131, %v1125, %v1070
  %v1135 = vsel %vm1131, %v1126, %v1072
  %v1136 = vsel %vm1131, %v1127, %v1074
  %v1137 = vsel %vm1131, %v1128, %v1076
  %v1138 = vsel %vm1131, %v1129, %v1078
  %v1139 = vsel %vm1131, %v1130, %v1080
  %vm1140 = vcmask 457728
  %v1141 = vsel %vm1140, %v1132, %v1018
  %v1142 = vsel %vm1140, %v1133, %v1020
  %v1143 = vsel %vm1140, %v1134, %v1022
  %v1144 = vsel %vm1140, %v1135, %v1024
  %v1145 = vsel %vm1140, %v1136, %v1026
  %v1146 = vsel %vm1140, %v1137, %v1028
  %v1147 = vsel %vm1140, %v1138, %v1030
  %v1148 = vsel %vm1140, %v1139, %v1032
  %v1149 = vmul.f32 %v761, %v1141
  %v1150 = vmul.f32 %v762, %v1142
  %v1151 = vmul.f32 %v763, %v1143
  %v1152 = vmul.f32 %v764, %v1144
  %v1153 = vmul.f32 %v765, %v1145
  %v1154 = vmul.f32 %v766, %v1146
  %v1155 = vmul.f32 %v767, %v1147
  %v1156 = vmul.f32 %v768, %v1148
  %v1157 = vmul.f32 %v1149, %v769
  %v1158 = vmul.f32 %v1150, %v770
  %v1159 = vmul.f32 %v1151, %v771
  %v1160 = vmul.f32 %v1152, %v772
  %v1161 = vmul.f32 %v1153, %v773
  %v1162 = vmul.f32 %v1154, %v774
  %v1163 = vmul.f32 %v1155, %v775
  %v1164 = vmul.f32 %v1156, %v776
  %v1165 = vld [vmem:[%s5] sm:$0x1]
  %v1166 = vlaneseq
  %v1167 = vshrl.u32 %v1166, 7
  %v1168 = vadd.s32 %v1167, 8
  %v1169 = vperm.slane %v1165, 0
  %vm1170 = vcmp.eq.s32.totalorder %v1167, %v1169
  %vm1171 = vcmp.eq.s32.totalorder %v1168, %v1169
  %v1172 = vsel %vm1170, 1, 0
  %v1173 = vsel %vm1171, 1, 0
  %v1174 = vcvt.s32.f32 %v1172
  %v1175 = vcvt.s32.f32 %v1173
  %v1177 = vsel %vm454, %v1174, 0
  %v1180 = vsel %vm454, %v1175, 0
  %1182 = vmatpush.msra.mxu0 0.0
  %1183 = vmatpush.msra.mxu0 0.0
  %1184 = vmatpush.msra.mxu0 0.0
  %1185 = vmatpush.msra.mxu0 0.0
  %1186 = vmatpush.msra.mxu0 0.0
  %1187 = vmatpush.msra.mxu0 0.0
  %1188 = vmatpush.msra.mxu0 0.0
  %1189 = vmatpush.msra.mxu0 0.0
  %1190 = vmatpush.msra.mxu0 %v1164
  %1191 = vmatpush.msra.mxu0 %v1163
  %1192 = vmatpush.msra.mxu0 %v1162
  %1193 = vmatpush.msra.mxu0 %v1161
  %1194 = vmatpush.msra.mxu0 %v1160
  %1195 = vmatpush.msra.mxu0 %v1159
  %1196 = vmatpush.msra.mxu0 %v1158
  %1197 = vmatpush.msra.mxu0 %v1157
  %1198 = vmatmul.f32.gmra.mxu0 %v1177
  %v1199 = vpop.f32.mrf.mxu0
  %v1200 = vadd.f32 0.0, %v1199
  %1201 = vmatmul.f32.gmra.mxu0 %v1180
  %v1202 = vpop.f32.mrf.mxu0
  %v1203 = vadd.f32 0.0, %v1202
  %1204 = vdwg.mxu0
  %v1205 = vsel %vm454, %v1174, 0.0
  %1206 = vadd.xlane.f32.xlu0 %v1205
  %v1207 = vpop.xlane.xlu0 %1206
  %v1208 = vsel %vm454, %v1175, 0.0
  %1209 = vadd.xlane.f32.xlu0 %v1208
  %v1210 = vpop.xlane.xlu0 %1209
  %v1211 = vmax.f32 %v1207, 1.0
  %v1212 = vmax.f32 %v1210, 1.0
  %v1213 = vrcp.pop %v1211
  %v1214 = vmul.f32 %v1211, %v1213
  %v1215 = vsub.f32 1.0, %v1214
  %v1216 = vmul.f32 %v1213, %v1215
  %v1217 = vadd.f32 %v1213, %v1216
  %vm1218 = vweird.f32 %v1211
  %vm1219 = vweird.f32 %v1213
  %vm1220 = vmor %vm1218, %vm1219
  %v1221 = vsel %vm1220, %v1213, %v1217
  %v1222 = vand.u32 2147483647, %v1211
  %vm1223 = vcmp.eq.f32.partialorder %v1222, 8.507059e+37
  %v1224 = vand.u32 %v1211, 2147483648
  %v1225 = vor.u32 1.1754944e-38, %v1224
  %v1226 = vsel %vm1223, %v1225, %v1221
  %v1227 = vmul.f32 %v1200, %v1226
  %v1228 = vrcp.pop %v1212
  %v1229 = vmul.f32 %v1212, %v1228
  %v1230 = vsub.f32 1.0, %v1229
  %v1231 = vmul.f32 %v1228, %v1230
  %v1232 = vadd.f32 %v1228, %v1231
  %vm1233 = vweird.f32 %v1212
  %vm1234 = vweird.f32 %v1228
  %vm1235 = vmor %vm1233, %vm1234
  %v1236 = vsel %vm1235, %v1228, %v1232
  %v1237 = vand.u32 2147483647, %v1212
  %vm1238 = vcmp.eq.f32.partialorder %v1237, 8.507059e+37
  %v1239 = vand.u32 %v1212, 2147483648
  %v1240 = vor.u32 1.1754944e-38, %v1239
  %v1241 = vsel %vm1238, %v1240, %v1236
  %v1242 = vmul.f32 %v1203, %v1241
  %v1243 = vld [vmem:[%s10] sm:$0xff]
  %v1244 = vld [vmem:[%s10 + $0x8] sm:$0xff]
  %v1245 = vld [vmem:[%s10 + $0x10] sm:$0xff]
  %v1246 = vld [vmem:[%s10 + $0x18] sm:$0xff]
  %v1247 = vld [vmem:[%s10 + $0x20] sm:$0xff]
  %v1248 = vld [vmem:[%s10 + $0x28] sm:$0xff]
  %v1249 = vld [vmem:[%s10 + $0x30] sm:$0xff]
  %v1250 = vld [vmem:[%s10 + $0x38] sm:$0xff]
  %v1252 = vsel %vm454, %v1227, 0
  %v1255 = vsel %vm454, %v1242, 0
  %1257 = vmatpush.msra.mxu0 0.0
  %1258 = vmatpush.msra.mxu0 0.0
  %1259 = vmatpush.msra.mxu0 0.0
  %1260 = vmatpush.msra.mxu0 0.0
  %1261 = vmatpush.msra.mxu0 0.0
  %1262 = vmatpush.msra.mxu0 0.0
  %1263 = vmatpush.msra.mxu0 0.0
  %1264 = vmatpush.msra.mxu0 0.0
  %1265 = vmatpush.msra.mxu0 %v1250
  %1266 = vmatpush.msra.mxu0 %v1249
  %1267 = vmatpush.msra.mxu0 %v1248
  %1268 = vmatpush.msra.mxu0 %v1247
  %1269 = vmatpush.msra.mxu0 %v1246
  %1270 = vmatpush.msra.mxu0 %v1245
  %1271 = vmatpush.msra.mxu0 %v1244
  %1272 = vmatpush.msra.mxu0 %v1243
  %1273 = vmatmul.f32.gmra.mxu0 %v1252
  %v1274 = vpop.f32.mrf.mxu0
  %v1275 = vadd.f32 0.0, %v1274
  %1276 = vmatmul.f32.gmra.mxu0 %v1255
  %v1277 = vpop.f32.mrf.mxu0
  %v1278 = vadd.f32 0.0, %v1277
  %1279 = vdwg.mxu0
  %v1280 = vmul.f32 %v1275, 0.25
  %v1281 = vmul.f32 %v1278, 0.25
  %v1282 = vld [vmem:[%s1] sm:$0xff]
  %v1283 = vld [vmem:[%s1 + $0x8] sm:$0xff]
  %1285 = vset.pattern.permute.xlu0 0
  %1286 = vperm.xlu0 %1285, %v1282
  %v1287 = vpop.permute.xlu0 %1286
  %1290 = vset.pattern.permute.xlu0 0
  %1291 = vperm.xlu0 %1290, %v1283
  %v1292 = vpop.permute.xlu0 %1291
  %v1294 = vmul.f32 %v41, %v1287
  %v1295 = vmul.f32 %v42, %v1292
  %1296 = vset.pattern.permute.xlu0 1
  %1297 = vperm.xlu0 %1296, %v1282
  %v1298 = vpop.permute.xlu0 %1297
  %1300 = vset.pattern.permute.xlu0 1
  %1301 = vperm.xlu0 %1300, %v1283
  %v1302 = vpop.permute.xlu0 %1301
  %v1304 = vmul.f32 %v41, %v1298
  %v1305 = vmul.f32 %v42, %v1302
  %1306 = vset.pattern.permute.xlu0 2
  %1307 = vperm.xlu0 %1306, %v1282
  %v1308 = vpop.permute.xlu0 %1307
  %1310 = vset.pattern.permute.xlu0 2
  %1311 = vperm.xlu0 %1310, %v1283
  %v1312 = vpop.permute.xlu0 %1311
  %v1314 = vmul.f32 %v41, %v1308
  %v1315 = vmul.f32 %v42, %v1312
  %1316 = vset.pattern.permute.xlu0 3
  %1317 = vperm.xlu0 %1316, %v1282
  %v1318 = vpop.permute.xlu0 %1317
  %1320 = vset.pattern.permute.xlu0 3
  %1321 = vperm.xlu0 %1320, %v1283
  %v1322 = vpop.permute.xlu0 %1321
  %v1324 = vmul.f32 %v41, %v1318
  %v1325 = vmul.f32 %v42, %v1322
  %1328 = vrot.lane.b32.xlu0 %v1304, 32
  %v1329 = vpop.permute.xlu0 %1328
  %1330 = vrot.lane.b32.xlu0 %v1305, 32
  %v1331 = vpop.permute.xlu0 %1330
  %1336 = vrot.lane.b32.xlu0 %v1314, 64
  %v1337 = vpop.permute.xlu0 %1336
  %1338 = vrot.lane.b32.xlu0 %v1315, 64
  %v1339 = vpop.permute.xlu0 %1338
  %1344 = vrot.lane.b32.xlu0 %v1324, 96
  %v1345 = vpop.permute.xlu0 %1344
  %1346 = vrot.lane.b32.xlu0 %v1325, 96
  %v1347 = vpop.permute.xlu0 %1346
  %v1350 = vsel %vm47, %v1294, %v1329
  %v1351 = vsel %vm47, %v1295, %v1331
  %v1352 = vsel %vm454, %v1350, %v1337
  %v1353 = vsel %vm454, %v1351, %v1339
  %vm1354 = vcmask 785408
  %v1355 = vsel %vm1354, %v1352, %v1345
  %v1356 = vsel %vm1354, %v1353, %v1347
  %v1357 = vld [vmem:[%s11] sm:$0xff]
  %v1358 = vld [vmem:[%s11 + $0x8] sm:$0xff]
  %v1359 = vld [vmem:[%s11 + $0x10] sm:$0xff]
  %v1360 = vld [vmem:[%s11 + $0x18] sm:$0xff]
  %v1361 = vld [vmem:[%s11 + $0x20] sm:$0xff]
  %v1362 = vld [vmem:[%s11 + $0x28] sm:$0xff]
  %v1363 = vld [vmem:[%s11 + $0x30] sm:$0xff]
  %v1364 = vld [vmem:[%s11 + $0x38] sm:$0xff]
  %v1365 = vld [vmem:[%s11 + $0x40] sm:$0xff]
  %v1366 = vld [vmem:[%s11 + $0x48] sm:$0xff]
  %v1367 = vld [vmem:[%s11 + $0x50] sm:$0xff]
  %v1368 = vld [vmem:[%s11 + $0x58] sm:$0xff]
  %v1369 = vld [vmem:[%s11 + $0x60] sm:$0xff]
  %v1370 = vld [vmem:[%s11 + $0x68] sm:$0xff]
  %v1371 = vld [vmem:[%s11 + $0x70] sm:$0xff]
  %v1372 = vld [vmem:[%s11 + $0x78] sm:$0xff]
  %1373 = vmatpush.msra.mxu0 %v1372
  %1374 = vmatpush.msra.mxu0 %v1371
  %1375 = vmatpush.msra.mxu0 %v1370
  %1376 = vmatpush.msra.mxu0 %v1369
  %1377 = vmatpush.msra.mxu0 %v1368
  %1378 = vmatpush.msra.mxu0 %v1367
  %1379 = vmatpush.msra.mxu0 %v1366
  %1380 = vmatpush.msra.mxu0 %v1365
  %1381 = vmatpush.msra.mxu0 %v1364
  %1382 = vmatpush.msra.mxu0 %v1363
  %1383 = vmatpush.msra.mxu0 %v1362
  %1384 = vmatpush.msra.mxu0 %v1361
  %1385 = vmatpush.msra.mxu0 %v1360
  %1386 = vmatpush.msra.mxu0 %v1359
  %1387 = vmatpush.msra.mxu0 %v1358
  %1388 = vmatpush.msra.mxu0 %v1357
  %1389 = vmatmul.f32.gmra.mxu0 %v1355
  %v1390 = vpop.f32.mrf.mxu0
  %v1391 = vadd.f32 0.0, %v1390
  %1392 = vmatmul.f32.gmra.mxu0 %v1356
  %v1393 = vpop.f32.mrf.mxu0
  %v1394 = vadd.f32 0.0, %v1393
  %1395 = vdwg.mxu0
  %v1396 = vmul.f32 %v1391, 0.17677669
  %v1397 = vmul.f32 %v1394, 0.17677669
  %v1398 = vadd.f32 %v1280, %v1396
  %v1399 = vadd.f32 %v1281, %v1397
  %v1400 = vxor.u32 %v1398, 2147483648
  %v1401 = vxor.u32 %v1399, 2147483648
  %v1402 = vmul.f32 %v1400, 1.442695
  %v1403 = vpow.pop %v1402
  %v1404 = vmul.f32 %v1401, 1.442695
  %v1405 = vpow.pop %v1404
  %v1406 = vadd.f32 %v1403, 1.0
  %v1407 = vadd.f32 %v1405, 1.0
  %v1408 = vrcp.pop %v1406
  %v1409 = vmul.f32 %v1406, %v1408
  %v1410 = vsub.f32 1.0, %v1409
  %v1411 = vmul.f32 %v1408, %v1410
  %v1412 = vadd.f32 %v1408, %v1411
  %vm1413 = vweird.f32 %v1406
  %vm1414 = vweird.f32 %v1408
  %vm1415 = vmor %vm1413, %vm1414
  %v1416 = vsel %vm1415, %v1408, %v1412
  %v1417 = vand.u32 2147483647, %v1406
  %vm1418 = vcmp.eq.f32.partialorder %v1417, 8.507059e+37
  %v1419 = vand.u32 %v1406, 2147483648
  %v1420 = vor.u32 1.1754944e-38, %v1419
  %v1421 = vsel %vm1418, %v1420, %v1416
  %v1422 = vmul.f32 1.0, %v1421
  %v1423 = vrcp.pop %v1407
  %v1424 = vmul.f32 %v1407, %v1423
  %v1425 = vsub.f32 1.0, %v1424
  %v1426 = vmul.f32 %v1423, %v1425
  %v1427 = vadd.f32 %v1423, %v1426
  %vm1428 = vweird.f32 %v1407
  %vm1429 = vweird.f32 %v1423
  %vm1430 = vmor %vm1428, %vm1429
  %v1431 = vsel %vm1430, %v1423, %v1427
  %v1432 = vand.u32 2147483647, %v1407
  %vm1433 = vcmp.eq.f32.partialorder %v1432, 8.507059e+37
  %v1434 = vand.u32 %v1407, 2147483648
  %v1435 = vor.u32 1.1754944e-38, %v1434
  %v1436 = vsel %vm1433, %v1435, %v1431
  %v1437 = vmul.f32 1.0, %v1436
  %v1438 = vmul.f32 %v1398, %v1422
  %v1439 = vmul.f32 %v1399, %v1437
  %1442 = vrot.lane.b32.xlu0 %v1398, 120
  %v1443 = vpop.permute.xlu0 %1442
  %1444 = vrot.lane.b32.xlu0 %v1399, 120
  %v1445 = vpop.permute.xlu0 %1444
  %v1448 = vmul.f32 %v1438, %v1443
  %v1449 = vmul.f32 %v1439, %v1445
  %1450 = vrot.lane.b32.xlu0 %v1398, 112
  %v1451 = vpop.permute.xlu0 %1450
  %1452 = vrot.lane.b32.xlu0 %v1399, 112
  %v1453 = vpop.permute.xlu0 %1452
  %v1456 = vmul.f32 %v1438, %v1451
  %v1457 = vmul.f32 %v1439, %v1453
  %1458 = vrot.lane.b32.xlu0 %v1398, 104
  %v1459 = vpop.permute.xlu0 %1458
  %1460 = vrot.lane.b32.xlu0 %v1399, 104
  %v1461 = vpop.permute.xlu0 %1460
  %v1464 = vmul.f32 %v1438, %v1459
  %v1465 = vmul.f32 %v1439, %v1461
  %1468 = vrot.lane.b32.xlu0 %v1456, 8
  %v1469 = vpop.permute.xlu0 %1468
  %1470 = vrot.lane.b32.xlu0 %v1457, 8
  %v1471 = vpop.permute.xlu0 %1470
  %1476 = vrot.lane.b32.xlu0 %v1464, 16
  %v1477 = vpop.permute.xlu0 %1476
  %1478 = vrot.lane.b32.xlu0 %v1465, 16
  %v1479 = vpop.permute.xlu0 %1478
  %v1482 = vsel %vm212, %v1438, %v1448
  %v1483 = vsel %vm212, %v1439, %v1449
  %v1484 = vsel %vm137, %v1482, %v1469
  %v1485 = vsel %vm137, %v1483, %v1471
  %v1486 = vsel %vm1105, %v1484, %v1477
  %v1487 = vsel %vm1105, %v1485, %v1479
  %1488 = vst.msk [vmem:[%s12] sm:$0xff] %vm47, %v1486
  %1489 = vst.msk [vmem:[%s12 + $0x8] sm:$0xff] %vm47, %v1487
  // Predicated region
  $region50: #{nequip_convolution.1} parent=0 // pred_check
    _
  $region51: #{nequip_convolution.1} parent=0 // pred_check_branch
    %1491 = sbr.rel (0) target = $region53
  $region52: #{nequip_convolution.1} parent=0 // pred_region
    _
  $region53: #{nequip_convolution.1} parent=0 // pred_fallthru
    _
  // Predicated region
  $region54: #{nequip_convolution.1} parent=0 // pred_check
    _
  $region55: #{nequip_convolution.1} parent=0 // pred_check_branch
    %1493 = sbr.rel (0) target = $region57
  $region56: #{nequip_convolution.1} parent=0 // pred_region
    _
  $region57: #{nequip_convolution.1} parent=0 // pred_fallthru
    _

</llo_original>
